<compile_context>
chip_gen: v7x
topology: tpu7x:2x2x1
jax: 0.10.0
libtpu: 0.0.40
codegen_flags: <defaults>
</compile_context>

<pallas_src>
import functools

import jax
import jax.numpy as jnp
import numpy as np
from jax.experimental import pallas as pl
from jax.experimental.pallas import tpu as pltpu


def _vspec():
    return pl.BlockSpec(memory_space=pltpu.MemorySpace.VMEM)


# ----------------------------------------------------------------------------
# Fused kernel: (conv+input-projection fold) -> biLSTM recurrence -> folded head
# ----------------------------------------------------------------------------
def fused_kernel(xwin_ref, wfold_ref, bfold_ref,
                 whh_f_ref, whh_b_ref,
                 whead_ref, bhead_ref,
                 out_ref, hsc_ref, *, T, NP, K, C_in):
    # xwin_ref:  (T*W, C_in) f32, W = NP+K-1, rows ordered (b major, position minor)
    # wfold_ref: (K*C_in, 8H) f32  = conv_w folded into [W_ih_f.T | W_ih_b.T]
    # bfold_ref: (1, 8H)      f32  = conv_b@wih_cat + (b_ih + b_hh) both directions
    # whh_*_ref: (H, 4H)      bf16
    # whead_ref: (1, 2H) f32, bhead_ref: (1, 1) f32   (dense1 @ dense2 folded)
    # out_ref:   (T, 1) f32
    # hsc_ref:   (T, 2H) f32 VMEM scratch for the last LSTM column, both directions
    H = whh_f_ref.shape[0]
    H4 = 4 * H
    W = NP + K - 1

    # --- conv + LSTM input projection, constant-folded weights (one shot) ---
    # gates_in[b*NP + j, :] = sum_k xwin[b*W + j + k, :] @ Wfold_k  + b_fold
    acc = None
    for k in range(K):
        if T == 1:
            xk = xwin_ref[k:k + NP, :]
        else:
            xk = jnp.concatenate(
                [xwin_ref[b * W + k: b * W + k + NP, :] for b in range(T)], axis=0)
        part = jnp.dot(xk, wfold_ref[k * C_in:(k + 1) * C_in, :],
                       preferred_element_type=jnp.float32)
        acc = part if acc is None else acc + part
    gates_in = acc + bfold_ref[...]                      # (T*NP, 8H), biases folded in

    def cell(gin, h, c, whh_ref):
        # gin already contains x @ W_ih + b_ih + b_hh ; recurrence matmul in bf16,
        # f32 accumulate; state and nonlinearities stay f32.
        g = gin + jnp.dot(h.astype(whh_ref.dtype), whh_ref[...],
                          preferred_element_type=jnp.float32)
        i = jax.nn.sigmoid(g[:, 0:H])
        f = jax.nn.sigmoid(g[:, H:2 * H])
        gg = jnp.tanh(g[:, 2 * H:3 * H])
        o = jax.nn.sigmoid(g[:, 3 * H:4 * H])
        c_new = f * c + i * gg
        h_new = o * jnp.tanh(c_new)
        return h_new, c_new

    zeros = jnp.zeros((NP, H), jnp.float32)
    h_f, c_f = zeros, zeros
    h_b, c_b = zeros, zeros

    # Interleaved fwd/bwd recurrence, fully unrolled (T is static and tiny).
    for s in range(T):
        tb = T - 1 - s
        gin_f = gates_in[s * NP:(s + 1) * NP, 0:H4]
        gin_b = gates_in[tb * NP:(tb + 1) * NP, H4:2 * H4]
        h_f, c_f = cell(gin_f, h_f, c_f, whh_f_ref)
        h_b, c_b = cell(gin_b, h_b, c_b, whh_b_ref)
        # Only the last LSTM "batch" column feeds the head; park it in VMEM so vreg
        # pressure stays constant across the unrolled loop.
        hsc_ref[s:s + 1, 0:H] = h_f[NP - 1:NP, :]
        hsc_ref[tb:tb + 1, H:2 * H] = h_b[NP - 1:NP, :]

    # --- folded dense head: y = feat @ w_head + b_head  (VPU mult + lane reduce) ---
    feat = hsc_ref[...]                                  # (T, 2H)
    y = jnp.sum(feat * whead_ref[...], axis=-1, keepdims=True) + bhead_ref[...]
    out_ref[...] = y


# ----------------------------------------------------------------------------
# One-time weight folding (hoisted out of the per-call path)
# ----------------------------------------------------------------------------
def prepare_params(params):
    C_out, C_in, K = params["conv_w"].shape
    # Input projection for both directions in one weight; LSTM biases folded in.
    wih_cat = jnp.concatenate([params["wih_f"].T, params["wih_b"].T], axis=1)  # (32, 8H)
    bcat = jnp.concatenate([params["bih_f"] + params["bhh_f"],
                            params["bih_b"] + params["bhh_b"]])                # (8H,)
    # Conv1d folded into the input projection (both linear -> exact).
    wfold = jnp.concatenate(
        [params["conv_w"][:, :, k].T @ wih_cat for k in range(K)], axis=0)     # (K*C_in, 8H)
    bfold = (params["conv_b"] @ wih_cat + bcat).reshape(1, -1)                 # (1, 8H)
    # dense(256->32) -> dense2(32->1) folded (no activation between; dropout = id).
    whead = (params["d1_w"].T @ params["d2_w"].T).reshape(1, -1)               # (1, 256)
    bhead = (params["d1_b"] @ params["d2_w"].T + params["d2_b"]).reshape(1, 1)  # (1, 1)
    return {
        "wfold": wfold.astype(jnp.float32),
        "bfold": bfold.astype(jnp.float32),
        "whh_f_t": params["whh_f"].T.astype(jnp.bfloat16),   # (H, 4H) bf16 MXU operand
        "whh_b_t": params["whh_b"].T.astype(jnp.bfloat16),
        "whead": whead.astype(jnp.float32),
        "bhead": bhead.astype(jnp.float32),
    }


# ----------------------------------------------------------------------------
# Jitted per-call wrapper: one tiny slice/transpose of x + one pallas_call
# ----------------------------------------------------------------------------
@jax.jit
def bilstm_forward(x, prepped):
    B, C_in, L = x.shape
    H = prepped["whh_f_t"].shape[0]
    K = prepped["wfold"].shape[0] // C_in
    Lo = L - K + 1
    assert Lo >= 1
    NP = min(8, Lo)                 # last NP conv positions (sublane-aligned)
    start = Lo - NP
    W = NP + K - 1                  # input positions feeding those NP conv columns

    # (B, C_in, L) -> last-W window, position-major rows: (B*W, C_in)
    xwin = jnp.transpose(x[:, :, start:start + W], (0, 2, 1)).reshape(B * W, C_in)

    kernel = functools.partial(fused_kernel, T=B, NP=NP, K=K, C_in=C_in)
    return pl.pallas_call(
        kernel,
        out_shape=jax.ShapeDtypeStruct((B, 1), jnp.float32),
        in_specs=[_vspec()] * 7,
        out_specs=_vspec(),
        scratch_shapes=[pltpu.VMEM((B, 2 * H), jnp.float32)],
    )(xwin, prepped["wfold"], prepped["bfold"],
      prepped["whh_f_t"], prepped["whh_b_t"],
      prepped["whead"], prepped["bhead"])


# ----------------------------------------------------------------------------
# Pure-JAX reference (full, un-optimized computation) for correctness check
# ----------------------------------------------------------------------------
def reference(x, params):
    B, _, L = x.shape
    K = params["conv_w"].shape[2]
    Lo = L - K + 1
    H = params["whh_f"].shape[1]

    co = sum(jnp.einsum("bcl,oc->bol", x[:, :, k:k + Lo], params["conv_w"][:, :, k])
             for k in range(K)) + params["conv_b"][None, :, None]
    xl = jnp.transpose(co, (0, 2, 1))                 # (B, Lo, 32) == (T, N, I)

    def run(xseq, wih, whh, bih, bhh, reverse):
        N = xseq.shape[1]

        def step(carry, x_t):
            h, c = carry
            g = x_t @ wih.T + h @ whh.T + bih + bhh
            i = jax.nn.sigmoid(g[:, :H])
            f = jax.nn.sigmoid(g[:, H:2 * H])
            gg = jnp.tanh(g[:, 2 * H:3 * H])
            o = jax.nn.sigmoid(g[:, 3 * H:])
            c = f * c + i * gg
            h = o * jnp.tanh(c)
            return (h, c), h

        init = (jnp.zeros((N, H), jnp.float32), jnp.zeros((N, H), jnp.float32))
        xs = xseq[::-1] if reverse else xseq
        _, hs = jax.lax.scan(step, init, xs)
        return hs[::-1] if reverse else hs

    hf = run(xl, params["wih_f"], params["whh_f"], params["bih_f"], params["bhh_f"], False)
    hb = run(xl, params["wih_b"], params["whh_b"], params["bih_b"], params["bhh_b"], True)
    feat = jnp.concatenate([hf, hb], axis=-1)[:, -1, :]
    h1 = feat @ params["d1_w"].T + params["d1_b"]
    return h1 @ params["d2_w"].T + params["d2_b"]


# ----------------------------------------------------------------------------
def make_params(key, input_size, hidden_size, kernel_size):
    ks = jax.random.split(key, 16)
    H, I = hidden_size, 32
    s = 0.1

    def rnd(k, shape):
        return (s * jax.random.normal(k, shape)).astype(jnp.float32)

    return {
        "conv_w": rnd(ks[0], (32, input_size, kernel_size)),
        "conv_b": rnd(ks[1], (32,)),
        "wih_f": rnd(ks[2], (4 * H, I)), "whh_f": rnd(ks[3], (4 * H, H)),
        "bih_f": rnd(ks[4], (4 * H,)),   "bhh_f": rnd(ks[5], (4 * H,)),
        "wih_b": rnd(ks[6], (4 * H, I)), "whh_b": rnd(ks[7], (4 * H, H)),
        "bih_b": rnd(ks[8], (4 * H,)),   "bhh_b": rnd(ks[9], (4 * H,)),
        "d1_w": rnd(ks[10], (32, 256)),  "d1_b": rnd(ks[11], (32,)),
        "d2_w": rnd(ks[12], (1, 32)),    "d2_b": rnd(ks[13], (1,)),
    }


if __name__ == "__main__":
    key = jax.random.PRNGKey(0)
    B, C_in, L = 2, 4, 16          # input to Conv1d: (B, C_in, L)
    kernel_size = 3
    hidden_size = 128              # forced by Linear(256, 32): 2*hidden == 256

    kx, kp = jax.random.split(key)
    x = jax.random.normal(kx, (B, C_in, L), dtype=jnp.float32)
    params = make_params(kp, C_in, hidden_size, kernel_size)

    prepped = prepare_params(params)   # one-time weight folding, hoisted out of the call
    y = bilstm_forward(x, prepped)
    y = jax.block_until_ready(y)
    assert y.shape == (B, 1), y.shape

    y_ref = reference(x, params)
    np.testing.assert_allclose(np.asarray(y), np.asarray(y_ref), rtol=2e-3, atol=2e-3)

    print("KERNEL_OK")
</pallas_src>

<mosaic_0001>
module attributes {stable_mosaic.version = 11 : i64} {
  func.func @fused_kernel(%arg0: memref<20x4xf32, #tpu.memory_space<vmem>>, %arg1: memref<12x1024xf32, #tpu.memory_space<vmem>>, %arg2: memref<1x1024xf32, #tpu.memory_space<vmem>>, %arg3: memref<128x512xbf16, #tpu.memory_space<vmem>>, %arg4: memref<128x512xbf16, #tpu.memory_space<vmem>>, %arg5: memref<1x256xf32, #tpu.memory_space<vmem>>, %arg6: memref<1x1xf32, #tpu.memory_space<vmem>>, %arg7: memref<2x1xf32, #tpu.memory_space<vmem>>, %arg8: memref<2x256xf32, #tpu.memory_space<vmem>>) attributes {dimension_semantics = [], scalar_prefetch = 0 : i64, scratch_operands = 1 : i64, tpu.core_type = #tpu.core_type<tc>} {
    %c0 = arith.constant 0 : index
    %c0_0 = arith.constant 0 : index
    %0 = vector.load %arg0[%c0, %c0_0] : memref<20x4xf32, #tpu.memory_space<vmem>>, vector<8x4xf32>
    %c10 = arith.constant 10 : index
    %c0_1 = arith.constant 0 : index
    %1 = vector.load %arg0[%c10, %c0_1] : memref<20x4xf32, #tpu.memory_space<vmem>>, vector<8x4xf32>
    %2 = tpu.concatenate %0, %1 in 0 : vector<8x4xf32>, vector<8x4xf32> -> vector<16x4xf32>
    %c0_2 = arith.constant 0 : index
    %c0_3 = arith.constant 0 : index
    %3 = vector.load %arg1[%c0_2, %c0_3] : memref<12x1024xf32, #tpu.memory_space<vmem>>, vector<4x1024xf32>
    %cst = arith.constant dense<0.000000e+00> : vector<16x1024xf32>
    %4 = tpu.matmul %2, %3, %cst {dimension_numbers = #tpu.dot_dimension_numbers<[1], [0], [0], [1], [0, 0, 1, 1], [], []>} : vector<16x4xf32>, vector<4x1024xf32>, vector<16x1024xf32> -> vector<16x1024xf32>
    %c1 = arith.constant 1 : index
    %c0_4 = arith.constant 0 : index
    %5 = vector.load %arg0[%c1, %c0_4] : memref<20x4xf32, #tpu.memory_space<vmem>>, vector<8x4xf32>
    %c11 = arith.constant 11 : index
    %c0_5 = arith.constant 0 : index
    %6 = vector.load %arg0[%c11, %c0_5] : memref<20x4xf32, #tpu.memory_space<vmem>>, vector<8x4xf32>
    %7 = tpu.concatenate %5, %6 in 0 : vector<8x4xf32>, vector<8x4xf32> -> vector<16x4xf32>
    %c4 = arith.constant 4 : index
    %c0_6 = arith.constant 0 : index
    %8 = vector.load %arg1[%c4, %c0_6] : memref<12x1024xf32, #tpu.memory_space<vmem>>, vector<4x1024xf32>
    %cst_7 = arith.constant dense<0.000000e+00> : vector<16x1024xf32>
    %9 = tpu.matmul %7, %8, %cst_7 {dimension_numbers = #tpu.dot_dimension_numbers<[1], [0], [0], [1], [0, 0, 1, 1], [], []>} : vector<16x4xf32>, vector<4x1024xf32>, vector<16x1024xf32> -> vector<16x1024xf32>
    %10 = arith.addf %4, %9 : vector<16x1024xf32>
    %c2 = arith.constant 2 : index
    %c0_8 = arith.constant 0 : index
    %11 = vector.load %arg0[%c2, %c0_8] : memref<20x4xf32, #tpu.memory_space<vmem>>, vector<8x4xf32>
    %c12 = arith.constant 12 : index
    %c0_9 = arith.constant 0 : index
    %12 = vector.load %arg0[%c12, %c0_9] : memref<20x4xf32, #tpu.memory_space<vmem>>, vector<8x4xf32>
    %13 = tpu.concatenate %11, %12 in 0 : vector<8x4xf32>, vector<8x4xf32> -> vector<16x4xf32>
    %c8 = arith.constant 8 : index
    %c0_10 = arith.constant 0 : index
    %14 = vector.load %arg1[%c8, %c0_10] : memref<12x1024xf32, #tpu.memory_space<vmem>>, vector<4x1024xf32>
    %cst_11 = arith.constant dense<0.000000e+00> : vector<16x1024xf32>
    %15 = tpu.matmul %13, %14, %cst_11 {dimension_numbers = #tpu.dot_dimension_numbers<[1], [0], [0], [1], [0, 0, 1, 1], [], []>} : vector<16x4xf32>, vector<4x1024xf32>, vector<16x1024xf32> -> vector<16x1024xf32>
    %16 = arith.addf %10, %15 : vector<16x1024xf32>
    %c0_12 = arith.constant 0 : index
    %c0_13 = arith.constant 0 : index
    %17 = vector.load %arg2[%c0_12, %c0_13] : memref<1x1024xf32, #tpu.memory_space<vmem>>, vector<1x1024xf32>
    %18 = vector.broadcast %17 : vector<1x1024xf32> to vector<16x1024xf32>
    %19 = arith.addf %16, %18 : vector<16x1024xf32>
    %cst_14 = arith.constant 0.000000e+00 : f32
    %20 = vector.broadcast %cst_14 : f32 to vector<8x128xf32>
    %21 = vector.extract_strided_slice %19 {offsets = [0, 0], sizes = [8, 512], strides = [1, 1]} : vector<16x1024xf32> to vector<8x512xf32>
    %22 = vector.extract_strided_slice %19 {offsets = [8, 512], sizes = [8, 512], strides = [1, 1]} : vector<16x1024xf32> to vector<8x512xf32>
    %23 = arith.truncf %20 : vector<8x128xf32> to vector<8x128xbf16>
    %c0_15 = arith.constant 0 : index
    %c0_16 = arith.constant 0 : index
    %24 = vector.load %arg3[%c0_15, %c0_16] : memref<128x512xbf16, #tpu.memory_space<vmem>>, vector<128x512xbf16>
    %cst_17 = arith.constant dense<0.000000e+00> : vector<8x512xf32>
    %25 = tpu.matmul %23, %24, %cst_17 {dimension_numbers = #tpu.dot_dimension_numbers<[1], [0], [0], [1], [0, 0, 1, 1], [], []>} : vector<8x128xbf16>, vector<128x512xbf16>, vector<8x512xf32> -> vector<8x512xf32>
    %26 = arith.addf %21, %25 : vector<8x512xf32>
    %27 = vector.extract_strided_slice %26 {offsets = [0, 0], sizes = [8, 128], strides = [1, 1]} : vector<8x512xf32> to vector<8x128xf32>
    %28 = arith.negf %27 : vector<8x128xf32>
    %29 = math.exp %28 : vector<8x128xf32>
    %cst_18 = arith.constant 1.000000e+00 : f32
    %30 = vector.broadcast %cst_18 : f32 to vector<8x128xf32>
    %31 = arith.addf %30, %29 : vector<8x128xf32>
    %32 = arith.divf %30, %31 : vector<8x128xf32>
    %33 = vector.extract_strided_slice %26 {offsets = [0, 128], sizes = [8, 128], strides = [1, 1]} : vector<8x512xf32> to vector<8x128xf32>
    %34 = arith.negf %33 : vector<8x128xf32>
    %35 = math.exp %34 : vector<8x128xf32>
    %cst_19 = arith.constant 1.000000e+00 : f32
    %36 = vector.broadcast %cst_19 : f32 to vector<8x128xf32>
    %37 = arith.addf %36, %35 : vector<8x128xf32>
    %38 = arith.divf %36, %37 : vector<8x128xf32>
    %39 = vector.extract_strided_slice %26 {offsets = [0, 256], sizes = [8, 128], strides = [1, 1]} : vector<8x512xf32> to vector<8x128xf32>
    %40 = math.tanh %39 : vector<8x128xf32>
    %41 = vector.extract_strided_slice %26 {offsets = [0, 384], sizes = [8, 128], strides = [1, 1]} : vector<8x512xf32> to vector<8x128xf32>
    %42 = arith.negf %41 : vector<8x128xf32>
    %43 = math.exp %42 : vector<8x128xf32>
    %cst_20 = arith.constant 1.000000e+00 : f32
    %44 = vector.broadcast %cst_20 : f32 to vector<8x128xf32>
    %45 = arith.addf %44, %43 : vector<8x128xf32>
    %46 = arith.divf %44, %45 : vector<8x128xf32>
    %47 = arith.mulf %38, %20 : vector<8x128xf32>
    %48 = arith.mulf %32, %40 : vector<8x128xf32>
    %49 = arith.addf %47, %48 : vector<8x128xf32>
    %50 = math.tanh %49 : vector<8x128xf32>
    %51 = arith.mulf %46, %50 : vector<8x128xf32>
    %52 = arith.truncf %20 : vector<8x128xf32> to vector<8x128xbf16>
    %c0_21 = arith.constant 0 : index
    %c0_22 = arith.constant 0 : index
    %53 = vector.load %arg4[%c0_21, %c0_22] : memref<128x512xbf16, #tpu.memory_space<vmem>>, vector<128x512xbf16>
    %cst_23 = arith.constant dense<0.000000e+00> : vector<8x512xf32>
    %54 = tpu.matmul %52, %53, %cst_23 {dimension_numbers = #tpu.dot_dimension_numbers<[1], [0], [0], [1], [0, 0, 1, 1], [], []>} : vector<8x128xbf16>, vector<128x512xbf16>, vector<8x512xf32> -> vector<8x512xf32>
    %55 = arith.addf %22, %54 : vector<8x512xf32>
    %56 = vector.extract_strided_slice %55 {offsets = [0, 0], sizes = [8, 128], strides = [1, 1]} : vector<8x512xf32> to vector<8x128xf32>
    %57 = arith.negf %56 : vector<8x128xf32>
    %58 = math.exp %57 : vector<8x128xf32>
    %cst_24 = arith.constant 1.000000e+00 : f32
    %59 = vector.broadcast %cst_24 : f32 to vector<8x128xf32>
    %60 = arith.addf %59, %58 : vector<8x128xf32>
    %61 = arith.divf %59, %60 : vector<8x128xf32>
    %62 = vector.extract_strided_slice %55 {offsets = [0, 128], sizes = [8, 128], strides = [1, 1]} : vector<8x512xf32> to vector<8x128xf32>
    %63 = arith.negf %62 : vector<8x128xf32>
    %64 = math.exp %63 : vector<8x128xf32>
    %cst_25 = arith.constant 1.000000e+00 : f32
    %65 = vector.broadcast %cst_25 : f32 to vector<8x128xf32>
    %66 = arith.addf %65, %64 : vector<8x128xf32>
    %67 = arith.divf %65, %66 : vector<8x128xf32>
    %68 = vector.extract_strided_slice %55 {offsets = [0, 256], sizes = [8, 128], strides = [1, 1]} : vector<8x512xf32> to vector<8x128xf32>
    %69 = math.tanh %68 : vector<8x128xf32>
    %70 = vector.extract_strided_slice %55 {offsets = [0, 384], sizes = [8, 128], strides = [1, 1]} : vector<8x512xf32> to vector<8x128xf32>
    %71 = arith.negf %70 : vector<8x128xf32>
    %72 = math.exp %71 : vector<8x128xf32>
    %cst_26 = arith.constant 1.000000e+00 : f32
    %73 = vector.broadcast %cst_26 : f32 to vector<8x128xf32>
    %74 = arith.addf %73, %72 : vector<8x128xf32>
    %75 = arith.divf %73, %74 : vector<8x128xf32>
    %76 = arith.mulf %67, %20 : vector<8x128xf32>
    %77 = arith.mulf %61, %69 : vector<8x128xf32>
    %78 = arith.addf %76, %77 : vector<8x128xf32>
    %79 = math.tanh %78 : vector<8x128xf32>
    %80 = arith.mulf %75, %79 : vector<8x128xf32>
    %81 = vector.extract_strided_slice %51 {offsets = [7, 0], sizes = [1, 128], strides = [1, 1]} : vector<8x128xf32> to vector<1x128xf32>
    %c0_27 = arith.constant 0 : index
    %c0_28 = arith.constant 0 : index
    %82 = vector.load %arg8[%c0_27, %c0_28] : memref<2x256xf32, #tpu.memory_space<vmem>>, vector<1x128xf32>
    tpu.vector_store %arg8[%c0_27, %c0_28], %81 {strides = array<i32>} : memref<2x256xf32, #tpu.memory_space<vmem>>, vector<1x128xf32>,
    %83 = vector.extract_strided_slice %80 {offsets = [7, 0], sizes = [1, 128], strides = [1, 1]} : vector<8x128xf32> to vector<1x128xf32>
    %c1_29 = arith.constant 1 : index
    %c128 = arith.constant 128 : index
    %84 = vector.load %arg8[%c1_29, %c128] : memref<2x256xf32, #tpu.memory_space<vmem>>, vector<1x128xf32>
    tpu.vector_store %arg8[%c1_29, %c128], %83 {strides = array<i32>} : memref<2x256xf32, #tpu.memory_space<vmem>>, vector<1x128xf32>,
    %85 = vector.extract_strided_slice %19 {offsets = [8, 0], sizes = [8, 512], strides = [1, 1]} : vector<16x1024xf32> to vector<8x512xf32>
    %86 = vector.extract_strided_slice %19 {offsets = [0, 512], sizes = [8, 512], strides = [1, 1]} : vector<16x1024xf32> to vector<8x512xf32>
    %87 = arith.truncf %51 : vector<8x128xf32> to vector<8x128xbf16>
    %c0_30 = arith.constant 0 : index
    %c0_31 = arith.constant 0 : index
    %88 = vector.load %arg3[%c0_30, %c0_31] : memref<128x512xbf16, #tpu.memory_space<vmem>>, vector<128x512xbf16>
    %cst_32 = arith.constant dense<0.000000e+00> : vector<8x512xf32>
    %89 = tpu.matmul %87, %88, %cst_32 {dimension_numbers = #tpu.dot_dimension_numbers<[1], [0], [0], [1], [0, 0, 1, 1], [], []>} : vector<8x128xbf16>, vector<128x512xbf16>, vector<8x512xf32> -> vector<8x512xf32>
    %90 = arith.addf %85, %89 : vector<8x512xf32>
    %91 = vector.extract_strided_slice %90 {offsets = [0, 0], sizes = [8, 128], strides = [1, 1]} : vector<8x512xf32> to vector<8x128xf32>
    %92 = arith.negf %91 : vector<8x128xf32>
    %93 = math.exp %92 : vector<8x128xf32>
    %cst_33 = arith.constant 1.000000e+00 : f32
    %94 = vector.broadcast %cst_33 : f32 to vector<8x128xf32>
    %95 = arith.addf %94, %93 : vector<8x128xf32>
    %96 = arith.divf %94, %95 : vector<8x128xf32>
    %97 = vector.extract_strided_slice %90 {offsets = [0, 128], sizes = [8, 128], strides = [1, 1]} : vector<8x512xf32> to vector<8x128xf32>
    %98 = arith.negf %97 : vector<8x128xf32>
    %99 = math.exp %98 : vector<8x128xf32>
    %cst_34 = arith.constant 1.000000e+00 : f32
    %100 = vector.broadcast %cst_34 : f32 to vector<8x128xf32>
    %101 = arith.addf %100, %99 : vector<8x128xf32>
    %102 = arith.divf %100, %101 : vector<8x128xf32>
    %103 = vector.extract_strided_slice %90 {offsets = [0, 256], sizes = [8, 128], strides = [1, 1]} : vector<8x512xf32> to vector<8x128xf32>
    %104 = math.tanh %103 : vector<8x128xf32>
    %105 = vector.extract_strided_slice %90 {offsets = [0, 384], sizes = [8, 128], strides = [1, 1]} : vector<8x512xf32> to vector<8x128xf32>
    %106 = arith.negf %105 : vector<8x128xf32>
    %107 = math.exp %106 : vector<8x128xf32>
    %cst_35 = arith.constant 1.000000e+00 : f32
    %108 = vector.broadcast %cst_35 : f32 to vector<8x128xf32>
    %109 = arith.addf %108, %107 : vector<8x128xf32>
    %110 = arith.divf %108, %109 : vector<8x128xf32>
    %111 = arith.mulf %102, %49 : vector<8x128xf32>
    %112 = arith.mulf %96, %104 : vector<8x128xf32>
    %113 = arith.addf %111, %112 : vector<8x128xf32>
    %114 = math.tanh %113 : vector<8x128xf32>
    %115 = arith.mulf %110, %114 : vector<8x128xf32>
    %116 = arith.truncf %80 : vector<8x128xf32> to vector<8x128xbf16>
    %c0_36 = arith.constant 0 : index
    %c0_37 = arith.constant 0 : index
    %117 = vector.load %arg4[%c0_36, %c0_37] : memref<128x512xbf16, #tpu.memory_space<vmem>>, vector<128x512xbf16>
    %cst_38 = arith.constant dense<0.000000e+00> : vector<8x512xf32>
    %118 = tpu.matmul %116, %117, %cst_38 {dimension_numbers = #tpu.dot_dimension_numbers<[1], [0], [0], [1], [0, 0, 1, 1], [], []>} : vector<8x128xbf16>, vector<128x512xbf16>, vector<8x512xf32> -> vector<8x512xf32>
    %119 = arith.addf %86, %118 : vector<8x512xf32>
    %120 = vector.extract_strided_slice %119 {offsets = [0, 0], sizes = [8, 128], strides = [1, 1]} : vector<8x512xf32> to vector<8x128xf32>
    %121 = arith.negf %120 : vector<8x128xf32>
    %122 = math.exp %121 : vector<8x128xf32>
    %cst_39 = arith.constant 1.000000e+00 : f32
    %123 = vector.broadcast %cst_39 : f32 to vector<8x128xf32>
    %124 = arith.addf %123, %122 : vector<8x128xf32>
    %125 = arith.divf %123, %124 : vector<8x128xf32>
    %126 = vector.extract_strided_slice %119 {offsets = [0, 128], sizes = [8, 128], strides = [1, 1]} : vector<8x512xf32> to vector<8x128xf32>
    %127 = arith.negf %126 : vector<8x128xf32>
    %128 = math.exp %127 : vector<8x128xf32>
    %cst_40 = arith.constant 1.000000e+00 : f32
    %129 = vector.broadcast %cst_40 : f32 to vector<8x128xf32>
    %130 = arith.addf %129, %128 : vector<8x128xf32>
    %131 = arith.divf %129, %130 : vector<8x128xf32>
    %132 = vector.extract_strided_slice %119 {offsets = [0, 256], sizes = [8, 128], strides = [1, 1]} : vector<8x512xf32> to vector<8x128xf32>
    %133 = math.tanh %132 : vector<8x128xf32>
    %134 = vector.extract_strided_slice %119 {offsets = [0, 384], sizes = [8, 128], strides = [1, 1]} : vector<8x512xf32> to vector<8x128xf32>
    %135 = arith.negf %134 : vector<8x128xf32>
    %136 = math.exp %135 : vector<8x128xf32>
    %cst_41 = arith.constant 1.000000e+00 : f32
    %137 = vector.broadcast %cst_41 : f32 to vector<8x128xf32>
    %138 = arith.addf %137, %136 : vector<8x128xf32>
    %139 = arith.divf %137, %138 : vector<8x128xf32>
    %140 = arith.mulf %131, %78 : vector<8x128xf32>
    %141 = arith.mulf %125, %133 : vector<8x128xf32>
    %142 = arith.addf %140, %141 : vector<8x128xf32>
    %143 = math.tanh %142 : vector<8x128xf32>
    %144 = arith.mulf %139, %143 : vector<8x128xf32>
    %145 = vector.extract_strided_slice %115 {offsets = [7, 0], sizes = [1, 128], strides = [1, 1]} : vector<8x128xf32> to vector<1x128xf32>
    %c1_42 = arith.constant 1 : index
    %c0_43 = arith.constant 0 : index
    %146 = vector.load %arg8[%c1_42, %c0_43] : memref<2x256xf32, #tpu.memory_space<vmem>>, vector<1x128xf32>
    tpu.vector_store %arg8[%c1_42, %c0_43], %145 {strides = array<i32>} : memref<2x256xf32, #tpu.memory_space<vmem>>, vector<1x128xf32>,
    %147 = vector.extract_strided_slice %144 {offsets = [7, 0], sizes = [1, 128], strides = [1, 1]} : vector<8x128xf32> to vector<1x128xf32>
    %c0_44 = arith.constant 0 : index
    %c128_45 = arith.constant 128 : index
    %148 = vector.load %arg8[%c0_44, %c128_45] : memref<2x256xf32, #tpu.memory_space<vmem>>, vector<1x128xf32>
    tpu.vector_store %arg8[%c0_44, %c128_45], %147 {strides = array<i32>} : memref<2x256xf32, #tpu.memory_space<vmem>>, vector<1x128xf32>,
    %c0_46 = arith.constant 0 : index
    %c0_47 = arith.constant 0 : index
    %149 = vector.load %arg8[%c0_46, %c0_47] : memref<2x256xf32, #tpu.memory_space<vmem>>, vector<2x256xf32>
    %c0_48 = arith.constant 0 : index
    %c0_49 = arith.constant 0 : index
    %150 = vector.load %arg5[%c0_48, %c0_49] : memref<1x256xf32, #tpu.memory_space<vmem>>, vector<1x256xf32>
    %151 = vector.broadcast %150 : vector<1x256xf32> to vector<2x256xf32>
    %152 = arith.mulf %149, %151 : vector<2x256xf32>
    %cst_50 = arith.constant dense<0.000000e+00> : vector<2xf32>
    %153 = vector.multi_reduction <add>, %152, %cst_50 [1] : vector<2x256xf32> to vector<2xf32>
    %154 = vector.shape_cast %153 : vector<2xf32> to vector<2x1xf32>
    %c0_51 = arith.constant 0 : index
    %c0_52 = arith.constant 0 : index
    %155 = vector.load %arg6[%c0_51, %c0_52] : memref<1x1xf32, #tpu.memory_space<vmem>>, vector<1x1xf32>
    %156 = vector.broadcast %155 : vector<1x1xf32> to vector<2x1xf32>
    %157 = arith.addf %154, %156 : vector<2x1xf32>
    %c0_53 = arith.constant 0 : index
    %c0_54 = arith.constant 0 : index
    %158 = vector.load %arg7[%c0_53, %c0_54] : memref<2x1xf32, #tpu.memory_space<vmem>>, vector<2x1xf32>
    tpu.vector_store %arg7[%c0_53, %c0_54], %157 {strides = array<i32>} : memref<2x1xf32, #tpu.memory_space<vmem>>, vector<2x1xf32>,
    return
  }
}

</mosaic_0001>

<llo_original>
// kernel: bilstm_forward.1
$region0: #{bilstm_forward.1}
  #allocation0 [shape = 'u32[]', space=smem, size = 0x4, offset = 0x4, fixed_abs, tag = 'smem constant byte address 0x4 - core index']
  #allocation1 [shape = 'u32[144,128]{1,0:T(1,128)}', space=vmem, size = 0x12000, scoped, tag = 'internal scratch']
  #allocation2 [shape = 'f32[2,256]{1,0:T(2,128)}', space=vmem, size = 0x800, scoped, tag = 'scratch operand']
  #allocation3 [shape = 'f32[1,1]{1,0:T(1,128)S(1)}', space=vmem, size = 0x200, scoped, tag = 'scoped memory for bilstm_forward.1']
  %s0 = inlined_call_operand.vmem [shape: f32[20,4], index: 0, kind: input, shape index: {}]
  %s1 = inlined_call_operand.hbm [shape: f32[12,1024], index: 1, kind: input, shape index: {}]
  %s2 = inlined_call_operand.vmem [shape: f32[1,1024], index: 2, kind: input, shape index: {}]
  %s3 = inlined_call_operand.hbm [shape: bf16[128,512], index: 3, kind: input, shape index: {}]
  %s4 = inlined_call_operand.hbm [shape: bf16[128,512], index: 4, kind: input, shape index: {}]
  %s5 = inlined_call_operand.vmem [shape: f32[1,256], index: 5, kind: input, shape index: {}]
  %s6 = inlined_call_operand.<no memory space> [shape: f32[1,1], index: 6, kind: input, shape index: {}]
  %s7 = inlined_call_operand.vmem [shape: f32[2,1], index: 7, kind: output, shape index: {}]
  %s8 = sld [smem:[#allocation0]]
  $region50: #{bilstm_forward.1} parent=0
    _
  %s10 = ssub.s32 1, %s8
  %s11 = scalar_select 0, %s10, %s8
  %v12 = vstv %s6
  %13 = vst [vmem:[#allocation3] sm:$0x1] %v12
  $region1: #{bilstm_forward.1} parent=0
    #allocation4 [shape = 'u8[65536]{0}', space=vmem, size = 0x10000, scoped, tag = 'input window, operand 1, single buffered']
    #allocation5 [shape = 's32[1]{0}', space=sflag, size = 0x4, scoped, tag = 'scoped memory for bilstm_forward.1']
    #allocation6 [shape = 'u8[131072]{0}', space=vmem, size = 0x20000, scoped, tag = 'input window, operand 3, single buffered']
    #allocation7 [shape = 's32[1]{0}', space=sflag, size = 0x4, scoped, tag = 'scoped memory for bilstm_forward.1']
    #allocation8 [shape = 'u8[131072]{0}', space=vmem, size = 0x20000, scoped, tag = 'input window, operand 4, single buffered']
    %14 = vsyncpa [#allocation5], 0
    %15 = vsyncpa [#allocation7], 0
    // Predicated region
    $region2: #{bilstm_forward.1} parent=1 // pred_check
      _
    $region3: #{bilstm_forward.1} parent=1 // pred_check_branch
      %17 = sbr.rel (0) target = $region5
    $region4: #{bilstm_forward.1} parent=1 // pred_region
      _
    $region5: #{bilstm_forward.1} parent=1 // pred_fallthru
      _
    // Predicated region
    $region6: #{bilstm_forward.1} parent=1 // pred_check
      _
    $region7: #{bilstm_forward.1} parent=1 // pred_check_branch
      %19 = sbr.rel (0) target = $region9
    $region8: #{bilstm_forward.1} parent=1 // pred_region
      %s21 = ssub.s32 2048, 2048
      %22 = vsyncadd [#allocation5], %s21
      %s23 = sshll.u32 [#allocation4], 4
      %s24 = int_to_ptr.vmem [resolvable:$true] %s23
      %29 = dma.hbm_to_vmem [thread:$0]  %s1, 2048, %s24, [#allocation5], 1024, 1024, 64
    $region9: #{bilstm_forward.1} parent=1 // pred_fallthru
      _
    // Predicated region
    $region10: #{bilstm_forward.1} parent=1 // pred_check
      _
    $region11: #{bilstm_forward.1} parent=1 // pred_check_branch
      %31 = sbr.rel (0) target = $region13
    $region12: #{bilstm_forward.1} parent=1 // pred_region
      _
    $region13: #{bilstm_forward.1} parent=1 // pred_fallthru
      _
    // Predicated region
    $region14: #{bilstm_forward.1} parent=1 // pred_check
      _
    $region15: #{bilstm_forward.1} parent=1 // pred_check_branch
      %33 = sbr.rel (0) target = $region17
    $region16: #{bilstm_forward.1} parent=1 // pred_region
      %s35 = ssub.s32 4096, 4096
      %36 = vsyncadd [#allocation7], %s35
      %s37 = sshll.u32 [#allocation6], 4
      %s38 = int_to_ptr.vmem [resolvable:$true] %s37
      %43 = dma.hbm_to_vmem [thread:$0]  %s3, 4096, %s38, [#allocation7], 256, 256, 16
    $region17: #{bilstm_forward.1} parent=1 // pred_fallthru
      _
    // Predicated region
    $region18: #{bilstm_forward.1} parent=1 // pred_check
      _
    $region19: #{bilstm_forward.1} parent=1 // pred_check_branch
      %45 = sbr.rel (0) target = $region21
    $region20: #{bilstm_forward.1} parent=1 // pred_region
      %s47 = ssub.s32 4096, 4096
      %48 = vsyncadd [#allocation7], %s47
      %s49 = sshll.u32 [#allocation8], 4
      %s50 = int_to_ptr.vmem [resolvable:$true] %s49
      %55 = dma.hbm_to_vmem [thread:$0]  %s4, 4096, %s50, [#allocation7], 256, 256, 16
    $region21: #{bilstm_forward.1} parent=1 // pred_fallthru
      _
    // Predicated region
    $region22: #{bilstm_forward.1} parent=1 // pred_check
      _
    $region23: #{bilstm_forward.1} parent=1 // pred_check_branch
      %57 = sbr.rel (0) target = $region25
    $region24: #{bilstm_forward.1} parent=1 // pred_region
      _
    $region25: #{bilstm_forward.1} parent=1 // pred_fallthru
      _
    // Predicated region
    $region26: #{bilstm_forward.1} parent=1 // pred_check
      _
    $region27: #{bilstm_forward.1} parent=1 // pred_check_branch
      %59 = sbr.rel (0) target = $region29
    $region28: #{bilstm_forward.1} parent=1 // pred_region
      _
    $region29: #{bilstm_forward.1} parent=1 // pred_fallthru
      _
    // Predicated region
    $region30: #{bilstm_forward.1} parent=1 // pred_check
      _
    $region31: #{bilstm_forward.1} parent=1 // pred_check_branch
      %61 = sbr.rel (0) target = $region33
    $region32: #{bilstm_forward.1} parent=1 // pred_region
      %62 = dma.done [#allocation5], 2048
    $region33: #{bilstm_forward.1} parent=1 // pred_fallthru
      _
    // Predicated region
    $region34: #{bilstm_forward.1} parent=1 // pred_check
      _
    $region35: #{bilstm_forward.1} parent=1 // pred_check_branch
      %64 = sbr.rel (0) target = $region37
    $region36: #{bilstm_forward.1} parent=1 // pred_region
      %65 = dma.done [#allocation7], 4096
    $region37: #{bilstm_forward.1} parent=1 // pred_fallthru
      _
    // Predicated region
    $region38: #{bilstm_forward.1} parent=1 // pred_check
      _
    $region39: #{bilstm_forward.1} parent=1 // pred_check_branch
      %67 = sbr.rel (0) target = $region41
    $region40: #{bilstm_forward.1} parent=1 // pred_region
      %68 = dma.done [#allocation7], 4096
    $region41: #{bilstm_forward.1} parent=1 // pred_fallthru
      _
    %v70 = vld [vmem:[%s0] sm:$0xff]
    %v71 = vld [vmem:[%s0 + $0xa] sm:$0xff]
    %v72 = vld [vmem:[#allocation4] sm:$0xf]
    %v73 = vld [vmem:[#allocation4 + $0x8] sm:$0xf]
    %v74 = vld [vmem:[#allocation4 + $0x10] sm:$0xf]
    %v75 = vld [vmem:[#allocation4 + $0x18] sm:$0xf]
    %v76 = vld [vmem:[#allocation4 + $0x20] sm:$0xf]
    %v77 = vld [vmem:[#allocation4 + $0x28] sm:$0xf]
    %v78 = vld [vmem:[#allocation4 + $0x30] sm:$0xf]
    %v79 = vld [vmem:[#allocation4 + $0x38] sm:$0xf]
    %v80 = vld [vmem:[%s0 + $0x1] sm:$0xff]
    %v81 = vld [vmem:[%s0 + $0xb] sm:$0xff]
    %v82 = vld [vmem:[#allocation4] sm:$0xf0]
    %v83 = vld [vmem:[#allocation4 + $0x8] sm:$0xf0]
    %v84 = vld [vmem:[#allocation4 + $0x10] sm:$0xf0]
    %v85 = vld [vmem:[#allocation4 + $0x18] sm:$0xf0]
    %v86 = vld [vmem:[#allocation4 + $0x20] sm:$0xf0]
    %v87 = vld [vmem:[#allocation4 + $0x28] sm:$0xf0]
    %v88 = vld [vmem:[#allocation4 + $0x30] sm:$0xf0]
    %v89 = vld [vmem:[#allocation4 + $0x38] sm:$0xf0]
    %v98 = vrot.slane %v82, 4
    %v99 = vrot.slane %v83, 4
    %v100 = vrot.slane %v84, 4
    %v101 = vrot.slane %v85, 4
    %v102 = vrot.slane %v86, 4
    %v103 = vrot.slane %v87, 4
    %v104 = vrot.slane %v88, 4
    %v105 = vrot.slane %v89, 4
    %vm106 = vcmask 31744
    %v108 = vsel %vm106, %v80, 0
    %v111 = vsel %vm106, %v81, 0
    %vm113 = vcmask 1043456
    %v114 = vsel %vm113, %v98, 0
    %v116 = vsel %vm113, %v99, 0
    %v118 = vsel %vm113, %v100, 0
    %v120 = vsel %vm113, %v101, 0
    %v122 = vsel %vm113, %v102, 0
    %v124 = vsel %vm113, %v103, 0
    %v126 = vsel %vm113, %v104, 0
    %v128 = vsel %vm113, %v105, 0
    %130 = vmatprep.subr.mxu0 %v116
    %131 = vmatpush1.msra.mxu0 %v114
    %132 = vmatprep.subr.mxu0 0.0
    %133 = vmatpush1.msra.mxu0 0.0
    %134 = vmatprep.subr.mxu0 0.0
    %135 = vmatpush1.msra.mxu0 0.0
    %136 = vmatprep.subr.mxu0 0.0
    %137 = vmatpush1.msra.mxu0 0.0
    %138 = vmatprep.subr.mxu0 0.0
    %139 = vmatpush1.msra.mxu0 0.0
    %140 = vmatprep.subr.mxu0 0.0
    %141 = vmatpush1.msra.mxu0 0.0
    %142 = vmatprep.subr.mxu0 0.0
    %143 = vmatpush1.msra.mxu0 0.0
    %144 = vmatprep.subr.mxu0 0.0
    %145 = vmatpush1.msra.mxu0 0.0
    %146 = vmatprep.subr.mxu0 0.0
    %147 = vmatpush1.msra.mxu0 0.0
    %148 = vmatprep.subr.mxu0 0.0
    %149 = vmatpush1.msra.mxu0 0.0
    %150 = vmatprep.subr.mxu0 0.0
    %151 = vmatpush1.msra.mxu0 0.0
    %152 = vmatprep.subr.mxu0 0.0
    %153 = vmatpush1.msra.mxu0 0.0
    %154 = vmatprep.subr.mxu0 0.0
    %155 = vmatpush1.msra.mxu0 0.0
    %156 = vmatprep.subr.mxu0 0.0
    %157 = vmatpush1.msra.mxu0 0.0
    %158 = vmatprep.subr.mxu0 0.0
    %159 = vmatpush1.msra.mxu0 0.0
    %160 = vmatprep.subr.mxu0 0.0
    %161 = vmatpush1.msra.mxu0 0.0
    %162 = vmatprep.subr.mxu0 0.0
    %163 = vmatpush1.msra.mxu0 0.0
    %164 = vmatprep.subr.mxu0 0.0
    %165 = vmatpush1.msra.mxu0 0.0
    %166 = vmatprep.subr.mxu0 0.0
    %167 = vmatpush1.msra.mxu0 0.0
    %168 = vmatprep.subr.mxu0 0.0
    %169 = vmatpush1.msra.mxu0 0.0
    %170 = vmatprep.subr.mxu0 0.0
    %171 = vmatpush1.msra.mxu0 0.0
    %172 = vmatprep.subr.mxu0 0.0
    %173 = vmatpush1.msra.mxu0 0.0
    %174 = vmatprep.subr.mxu0 0.0
    %175 = vmatpush1.msra.mxu0 0.0
    %176 = vmatprep.subr.mxu0 0.0
    %177 = vmatpush1.msra.mxu0 0.0
    %178 = vmatprep.subr.mxu0 0.0
    %179 = vmatpush1.msra.mxu0 0.0
    %180 = vmatprep.subr.mxu0 0.0
    %181 = vmatpush1.msra.mxu0 0.0
    %182 = vmatprep.subr.mxu0 0.0
    %183 = vmatpush1.msra.mxu0 0.0
    %184 = vmatprep.subr.mxu0 0.0
    %185 = vmatpush1.msra.mxu0 0.0
    %186 = vmatprep.subr.mxu0 0.0
    %187 = vmatpush1.msra.mxu0 0.0
    %188 = vmatprep.subr.mxu0 0.0
    %189 = vmatpush1.msra.mxu0 0.0
    %190 = vmatprep.subr.mxu0 0.0
    %191 = vmatpush1.msra.mxu0 0.0
    %192 = vmatprep.subr.mxu0 0.0
    %193 = vmatpush1.msra.mxu0 0.0
    %194 = vmatprep.mubr.f32.mxu0 0.0
    %195 = vmatmul.mubr.f32.gmra.mrb[0].mxu0 %v108
    %v196 = vpop.f32.mrb[0].mxu0
    %v197 = vadd.f32 0.0, %v196
    %v198 = vpop.f32.mrb[0].mxu0
    %v199 = vadd.f32 0.0, %v198
    %200 = vmatprep.mubr.f32.mxu0 0.0
    %201 = vmatmul.mubr.f32.gmra.mrb[0].mxu0 %v111
    %v202 = vpop.f32.mrb[0].mxu0
    %v203 = vadd.f32 0.0, %v202
    %v204 = vpop.f32.mrb[0].mxu0
    %v205 = vadd.f32 0.0, %v204
    %206 = vdwg.mxu0
    %207 = vmatprep.subr.mxu0 %v120
    %208 = vmatpush1.msra.mxu0 %v118
    %209 = vmatprep.subr.mxu0 0.0
    %210 = vmatpush1.msra.mxu0 0.0
    %211 = vmatprep.subr.mxu0 0.0
    %212 = vmatpush1.msra.mxu0 0.0
    %213 = vmatprep.subr.mxu0 0.0
    %214 = vmatpush1.msra.mxu0 0.0
    %215 = vmatprep.subr.mxu0 0.0
    %216 = vmatpush1.msra.mxu0 0.0
    %217 = vmatprep.subr.mxu0 0.0
    %218 = vmatpush1.msra.mxu0 0.0
    %219 = vmatprep.subr.mxu0 0.0
    %220 = vmatpush1.msra.mxu0 0.0
    %221 = vmatprep.subr.mxu0 0.0
    %222 = vmatpush1.msra.mxu0 0.0
    %223 = vmatprep.subr.mxu0 0.0
    %224 = vmatpush1.msra.mxu0 0.0
    %225 = vmatprep.subr.mxu0 0.0
    %226 = vmatpush1.msra.mxu0 0.0
    %227 = vmatprep.subr.mxu0 0.0
    %228 = vmatpush1.msra.mxu0 0.0
    %229 = vmatprep.subr.mxu0 0.0
    %230 = vmatpush1.msra.mxu0 0.0
    %231 = vmatprep.subr.mxu0 0.0
    %232 = vmatpush1.msra.mxu0 0.0
    %233 = vmatprep.subr.mxu0 0.0
    %234 = vmatpush1.msra.mxu0 0.0
    %235 = vmatprep.subr.mxu0 0.0
    %236 = vmatpush1.msra.mxu0 0.0
    %237 = vmatprep.subr.mxu0 0.0
    %238 = vmatpush1.msra.mxu0 0.0
    %239 = vmatprep.subr.mxu0 0.0
    %240 = vmatpush1.msra.mxu0 0.0
    %241 = vmatprep.subr.mxu0 0.0
    %242 = vmatpush1.msra.mxu0 0.0
    %243 = vmatprep.subr.mxu0 0.0
    %244 = vmatpush1.msra.mxu0 0.0
    %245 = vmatprep.subr.mxu0 0.0
    %246 = vmatpush1.msra.mxu0 0.0
    %247 = vmatprep.subr.mxu0 0.0
    %248 = vmatpush1.msra.mxu0 0.0
    %249 = vmatprep.subr.mxu0 0.0
    %250 = vmatpush1.msra.mxu0 0.0
    %251 = vmatprep.subr.mxu0 0.0
    %252 = vmatpush1.msra.mxu0 0.0
    %253 = vmatprep.subr.mxu0 0.0
    %254 = vmatpush1.msra.mxu0 0.0
    %255 = vmatprep.subr.mxu0 0.0
    %256 = vmatpush1.msra.mxu0 0.0
    %257 = vmatprep.subr.mxu0 0.0
    %258 = vmatpush1.msra.mxu0 0.0
    %259 = vmatprep.subr.mxu0 0.0
    %260 = vmatpush1.msra.mxu0 0.0
    %261 = vmatprep.subr.mxu0 0.0
    %262 = vmatpush1.msra.mxu0 0.0
    %263 = vmatprep.subr.mxu0 0.0
    %264 = vmatpush1.msra.mxu0 0.0
    %265 = vmatprep.subr.mxu0 0.0
    %266 = vmatpush1.msra.mxu0 0.0
    %267 = vmatprep.subr.mxu0 0.0
    %268 = vmatpush1.msra.mxu0 0.0
    %269 = vmatprep.subr.mxu0 0.0
    %270 = vmatpush1.msra.mxu0 0.0
    %271 = vmatprep.mubr.f32.mxu0 0.0
    %272 = vmatmul.mubr.f32.gmra.mrb[0].mxu0 %v108
    %v273 = vpop.f32.mrb[0].mxu0
    %v274 = vadd.f32 0.0, %v273
    %v275 = vpop.f32.mrb[0].mxu0
    %v276 = vadd.f32 0.0, %v275
    %277 = vmatprep.mubr.f32.mxu0 0.0
    %278 = vmatmul.mubr.f32.gmra.mrb[0].mxu0 %v111
    %v279 = vpop.f32.mrb[0].mxu0
    %v280 = vadd.f32 0.0, %v279
    %v281 = vpop.f32.mrb[0].mxu0
    %v282 = vadd.f32 0.0, %v281
    %283 = vdwg.mxu0
    %284 = vmatprep.subr.mxu0 %v124
    %285 = vmatpush1.msra.mxu0 %v122
    %286 = vmatprep.subr.mxu0 0.0
    %287 = vmatpush1.msra.mxu0 0.0
    %288 = vmatprep.subr.mxu0 0.0
    %289 = vmatpush1.msra.mxu0 0.0
    %290 = vmatprep.subr.mxu0 0.0
    %291 = vmatpush1.msra.mxu0 0.0
    %292 = vmatprep.subr.mxu0 0.0
    %293 = vmatpush1.msra.mxu0 0.0
    %294 = vmatprep.subr.mxu0 0.0
    %295 = vmatpush1.msra.mxu0 0.0
    %296 = vmatprep.subr.mxu0 0.0
    %297 = vmatpush1.msra.mxu0 0.0
    %298 = vmatprep.subr.mxu0 0.0
    %299 = vmatpush1.msra.mxu0 0.0
    %300 = vmatprep.subr.mxu0 0.0
    %301 = vmatpush1.msra.mxu0 0.0
    %302 = vmatprep.subr.mxu0 0.0
    %303 = vmatpush1.msra.mxu0 0.0
    %304 = vmatprep.subr.mxu0 0.0
    %305 = vmatpush1.msra.mxu0 0.0
    %306 = vmatprep.subr.mxu0 0.0
    %307 = vmatpush1.msra.mxu0 0.0
    %308 = vmatprep.subr.mxu0 0.0
    %309 = vmatpush1.msra.mxu0 0.0
    %310 = vmatprep.subr.mxu0 0.0
    %311 = vmatpush1.msra.mxu0 0.0
    %312 = vmatprep.subr.mxu0 0.0
    %313 = vmatpush1.msra.mxu0 0.0
    %314 = vmatprep.subr.mxu0 0.0
    %315 = vmatpush1.msra.mxu0 0.0
    %316 = vmatprep.subr.mxu0 0.0
    %317 = vmatpush1.msra.mxu0 0.0
    %318 = vmatprep.subr.mxu0 0.0
    %319 = vmatpush1.msra.mxu0 0.0
    %320 = vmatprep.subr.mxu0 0.0
    %321 = vmatpush1.msra.mxu0 0.0
    %322 = vmatprep.subr.mxu0 0.0
    %323 = vmatpush1.msra.mxu0 0.0
    %324 = vmatprep.subr.mxu0 0.0
    %325 = vmatpush1.msra.mxu0 0.0
    %326 = vmatprep.subr.mxu0 0.0
    %327 = vmatpush1.msra.mxu0 0.0
    %328 = vmatprep.subr.mxu0 0.0
    %329 = vmatpush1.msra.mxu0 0.0
    %330 = vmatprep.subr.mxu0 0.0
    %331 = vmatpush1.msra.mxu0 0.0
    %332 = vmatprep.subr.mxu0 0.0
    %333 = vmatpush1.msra.mxu0 0.0
    %334 = vmatprep.subr.mxu0 0.0
    %335 = vmatpush1.msra.mxu0 0.0
    %336 = vmatprep.subr.mxu0 0.0
    %337 = vmatpush1.msra.mxu0 0.0
    %338 = vmatprep.subr.mxu0 0.0
    %339 = vmatpush1.msra.mxu0 0.0
    %340 = vmatprep.subr.mxu0 0.0
    %341 = vmatpush1.msra.mxu0 0.0
    %342 = vmatprep.subr.mxu0 0.0
    %343 = vmatpush1.msra.mxu0 0.0
    %344 = vmatprep.subr.mxu0 0.0
    %345 = vmatpush1.msra.mxu0 0.0
    %346 = vmatprep.subr.mxu0 0.0
    %347 = vmatpush1.msra.mxu0 0.0
    %348 = vmatprep.mubr.f32.mxu0 0.0
    %349 = vmatmul.mubr.f32.gmra.mrb[0].mxu0 %v108
    %v350 = vpop.f32.mrb[0].mxu0
    %v351 = vadd.f32 0.0, %v350
    %v352 = vpop.f32.mrb[0].mxu0
    %v353 = vadd.f32 0.0, %v352
    %354 = vmatprep.mubr.f32.mxu0 0.0
    %355 = vmatmul.mubr.f32.gmra.mrb[0].mxu0 %v111
    %v356 = vpop.f32.mrb[0].mxu0
    %v357 = vadd.f32 0.0, %v356
    %v358 = vpop.f32.mrb[0].mxu0
    %v359 = vadd.f32 0.0, %v358
    %360 = vdwg.mxu0
    %361 = vmatprep.subr.mxu0 %v128
    %362 = vmatpush1.msra.mxu0 %v126
    %363 = vmatprep.subr.mxu0 0.0
    %364 = vmatpush1.msra.mxu0 0.0
    %365 = vmatprep.subr.mxu0 0.0
    %366 = vmatpush1.msra.mxu0 0.0
    %367 = vmatprep.subr.mxu0 0.0
    %368 = vmatpush1.msra.mxu0 0.0
    %369 = vmatprep.subr.mxu0 0.0
    %370 = vmatpush1.msra.mxu0 0.0
    %371 = vmatprep.subr.mxu0 0.0
    %372 = vmatpush1.msra.mxu0 0.0
    %373 = vmatprep.subr.mxu0 0.0
    %374 = vmatpush1.msra.mxu0 0.0
    %375 = vmatprep.subr.mxu0 0.0
    %376 = vmatpush1.msra.mxu0 0.0
    %377 = vmatprep.subr.mxu0 0.0
    %378 = vmatpush1.msra.mxu0 0.0
    %379 = vmatprep.subr.mxu0 0.0
    %380 = vmatpush1.msra.mxu0 0.0
    %381 = vmatprep.subr.mxu0 0.0
    %382 = vmatpush1.msra.mxu0 0.0
    %383 = vmatprep.subr.mxu0 0.0
    %384 = vmatpush1.msra.mxu0 0.0
    %385 = vmatprep.subr.mxu0 0.0
    %386 = vmatpush1.msra.mxu0 0.0
    %387 = vmatprep.subr.mxu0 0.0
    %388 = vmatpush1.msra.mxu0 0.0
    %389 = vmatprep.subr.mxu0 0.0
    %390 = vmatpush1.msra.mxu0 0.0
    %391 = vmatprep.subr.mxu0 0.0
    %392 = vmatpush1.msra.mxu0 0.0
    %393 = vmatprep.subr.mxu0 0.0
    %394 = vmatpush1.msra.mxu0 0.0
    %395 = vmatprep.subr.mxu0 0.0
    %396 = vmatpush1.msra.mxu0 0.0
    %397 = vmatprep.subr.mxu0 0.0
    %398 = vmatpush1.msra.mxu0 0.0
    %399 = vmatprep.subr.mxu0 0.0
    %400 = vmatpush1.msra.mxu0 0.0
    %401 = vmatprep.subr.mxu0 0.0
    %402 = vmatpush1.msra.mxu0 0.0
    %403 = vmatprep.subr.mxu0 0.0
    %404 = vmatpush1.msra.mxu0 0.0
    %405 = vmatprep.subr.mxu0 0.0
    %406 = vmatpush1.msra.mxu0 0.0
    %407 = vmatprep.subr.mxu0 0.0
    %408 = vmatpush1.msra.mxu0 0.0
    %409 = vmatprep.subr.mxu0 0.0
    %410 = vmatpush1.msra.mxu0 0.0
    %411 = vmatprep.subr.mxu0 0.0
    %412 = vmatpush1.msra.mxu0 0.0
    %413 = vmatprep.subr.mxu0 0.0
    %414 = vmatpush1.msra.mxu0 0.0
    %415 = vmatprep.subr.mxu0 0.0
    %416 = vmatpush1.msra.mxu0 0.0
    %417 = vmatprep.subr.mxu0 0.0
    %418 = vmatpush1.msra.mxu0 0.0
    %419 = vmatprep.subr.mxu0 0.0
    %420 = vmatpush1.msra.mxu0 0.0
    %421 = vmatprep.subr.mxu0 0.0
    %422 = vmatpush1.msra.mxu0 0.0
    %423 = vmatprep.subr.mxu0 0.0
    %424 = vmatpush1.msra.mxu0 0.0
    %425 = vmatprep.mubr.f32.mxu0 0.0
    %426 = vmatmul.mubr.f32.gmra.mrb[0].mxu0 %v108
    %v427 = vpop.f32.mrb[0].mxu0
    %v428 = vadd.f32 0.0, %v427
    %v429 = vpop.f32.mrb[0].mxu0
    %v430 = vadd.f32 0.0, %v429
    %431 = vmatprep.mubr.f32.mxu0 0.0
    %432 = vmatmul.mubr.f32.gmra.mrb[0].mxu0 %v111
    %v433 = vpop.f32.mrb[0].mxu0
    %v434 = vadd.f32 0.0, %v433
    %v435 = vpop.f32.mrb[0].mxu0
    %v436 = vadd.f32 0.0, %v435
    %437 = vdwg.mxu0
    %v439 = vsel %vm106, %v70, 0
    %v442 = vsel %vm106, %v71, 0
    %v445 = vsel %vm113, %v72, 0
    %v448 = vsel %vm113, %v73, 0
    %v451 = vsel %vm113, %v74, 0
    %v454 = vsel %vm113, %v75, 0
    %v457 = vsel %vm113, %v76, 0
    %v460 = vsel %vm113, %v77, 0
    %v463 = vsel %vm113, %v78, 0
    %v466 = vsel %vm113, %v79, 0
    %468 = vmatprep.subr.mxu0 %v448
    %469 = vmatpush1.msra.mxu0 %v445
    %470 = vmatprep.subr.mxu0 0.0
    %471 = vmatpush1.msra.mxu0 0.0
    %472 = vmatprep.subr.mxu0 0.0
    %473 = vmatpush1.msra.mxu0 0.0
    %474 = vmatprep.subr.mxu0 0.0
    %475 = vmatpush1.msra.mxu0 0.0
    %476 = vmatprep.subr.mxu0 0.0
    %477 = vmatpush1.msra.mxu0 0.0
    %478 = vmatprep.subr.mxu0 0.0
    %479 = vmatpush1.msra.mxu0 0.0
    %480 = vmatprep.subr.mxu0 0.0
    %481 = vmatpush1.msra.mxu0 0.0
    %482 = vmatprep.subr.mxu0 0.0
    %483 = vmatpush1.msra.mxu0 0.0
    %484 = vmatprep.subr.mxu0 0.0
    %485 = vmatpush1.msra.mxu0 0.0
    %486 = vmatprep.subr.mxu0 0.0
    %487 = vmatpush1.msra.mxu0 0.0
    %488 = vmatprep.subr.mxu0 0.0
    %489 = vmatpush1.msra.mxu0 0.0
    %490 = vmatprep.subr.mxu0 0.0
    %491 = vmatpush1.msra.mxu0 0.0
    %492 = vmatprep.subr.mxu0 0.0
    %493 = vmatpush1.msra.mxu0 0.0
    %494 = vmatprep.subr.mxu0 0.0
    %495 = vmatpush1.msra.mxu0 0.0
    %496 = vmatprep.subr.mxu0 0.0
    %497 = vmatpush1.msra.mxu0 0.0
    %498 = vmatprep.subr.mxu0 0.0
    %499 = vmatpush1.msra.mxu0 0.0
    %500 = vmatprep.subr.mxu0 0.0
    %501 = vmatpush1.msra.mxu0 0.0
    %502 = vmatprep.subr.mxu0 0.0
    %503 = vmatpush1.msra.mxu0 0.0
    %504 = vmatprep.subr.mxu0 0.0
    %505 = vmatpush1.msra.mxu0 0.0
    %506 = vmatprep.subr.mxu0 0.0
    %507 = vmatpush1.msra.mxu0 0.0
    %508 = vmatprep.subr.mxu0 0.0
    %509 = vmatpush1.msra.mxu0 0.0
    %510 = vmatprep.subr.mxu0 0.0
    %511 = vmatpush1.msra.mxu0 0.0
    %512 = vmatprep.subr.mxu0 0.0
    %513 = vmatpush1.msra.mxu0 0.0
    %514 = vmatprep.subr.mxu0 0.0
    %515 = vmatpush1.msra.mxu0 0.0
    %516 = vmatprep.subr.mxu0 0.0
    %517 = vmatpush1.msra.mxu0 0.0
    %518 = vmatprep.subr.mxu0 0.0
    %519 = vmatpush1.msra.mxu0 0.0
    %520 = vmatprep.subr.mxu0 0.0
    %521 = vmatpush1.msra.mxu0 0.0
    %522 = vmatprep.subr.mxu0 0.0
    %523 = vmatpush1.msra.mxu0 0.0
    %524 = vmatprep.subr.mxu0 0.0
    %525 = vmatpush1.msra.mxu0 0.0
    %526 = vmatprep.subr.mxu0 0.0
    %527 = vmatpush1.msra.mxu0 0.0
    %528 = vmatprep.subr.mxu0 0.0
    %529 = vmatpush1.msra.mxu0 0.0
    %530 = vmatprep.subr.mxu0 0.0
    %531 = vmatpush1.msra.mxu0 0.0
    %532 = vmatprep.mubr.f32.mxu0 0.0
    %533 = vmatmul.mubr.f32.gmra.mrb[0].mxu0 %v439
    %v534 = vpop.f32.mrb[0].mxu0
    %v535 = vadd.f32 %v197, %v534
    %v536 = vpop.f32.mrb[0].mxu0
    %v537 = vadd.f32 %v199, %v536
    %538 = vmatprep.mubr.f32.mxu0 0.0
    %539 = vmatmul.mubr.f32.gmra.mrb[0].mxu0 %v442
    %v540 = vpop.f32.mrb[0].mxu0
    %v541 = vadd.f32 %v203, %v540
    %v542 = vpop.f32.mrb[0].mxu0
    %v543 = vadd.f32 %v205, %v542
    %544 = vdwg.mxu0
    %545 = vmatprep.subr.mxu0 %v454
    %546 = vmatpush1.msra.mxu0 %v451
    %547 = vmatprep.subr.mxu0 0.0
    %548 = vmatpush1.msra.mxu0 0.0
    %549 = vmatprep.subr.mxu0 0.0
    %550 = vmatpush1.msra.mxu0 0.0
    %551 = vmatprep.subr.mxu0 0.0
    %552 = vmatpush1.msra.mxu0 0.0
    %553 = vmatprep.subr.mxu0 0.0
    %554 = vmatpush1.msra.mxu0 0.0
    %555 = vmatprep.subr.mxu0 0.0
    %556 = vmatpush1.msra.mxu0 0.0
    %557 = vmatprep.subr.mxu0 0.0
    %558 = vmatpush1.msra.mxu0 0.0
    %559 = vmatprep.subr.mxu0 0.0
    %560 = vmatpush1.msra.mxu0 0.0
    %561 = vmatprep.subr.mxu0 0.0
    %562 = vmatpush1.msra.mxu0 0.0
    %563 = vmatprep.subr.mxu0 0.0
    %564 = vmatpush1.msra.mxu0 0.0
    %565 = vmatprep.subr.mxu0 0.0
    %566 = vmatpush1.msra.mxu0 0.0
    %567 = vmatprep.subr.mxu0 0.0
    %568 = vmatpush1.msra.mxu0 0.0
    %569 = vmatprep.subr.mxu0 0.0
    %570 = vmatpush1.msra.mxu0 0.0
    %571 = vmatprep.subr.mxu0 0.0
    %572 = vmatpush1.msra.mxu0 0.0
    %573 = vmatprep.subr.mxu0 0.0
    %574 = vmatpush1.msra.mxu0 0.0
    %575 = vmatprep.subr.mxu0 0.0
    %576 = vmatpush1.msra.mxu0 0.0
    %577 = vmatprep.subr.mxu0 0.0
    %578 = vmatpush1.msra.mxu0 0.0
    %579 = vmatprep.subr.mxu0 0.0
    %580 = vmatpush1.msra.mxu0 0.0
    %581 = vmatprep.subr.mxu0 0.0
    %582 = vmatpush1.msra.mxu0 0.0
    %583 = vmatprep.subr.mxu0 0.0
    %584 = vmatpush1.msra.mxu0 0.0
    %585 = vmatprep.subr.mxu0 0.0
    %586 = vmatpush1.msra.mxu0 0.0
    %587 = vmatprep.subr.mxu0 0.0
    %588 = vmatpush1.msra.mxu0 0.0
    %589 = vmatprep.subr.mxu0 0.0
    %590 = vmatpush1.msra.mxu0 0.0
    %591 = vmatprep.subr.mxu0 0.0
    %592 = vmatpush1.msra.mxu0 0.0
    %593 = vmatprep.subr.mxu0 0.0
    %594 = vmatpush1.msra.mxu0 0.0
    %595 = vmatprep.subr.mxu0 0.0
    %596 = vmatpush1.msra.mxu0 0.0
    %597 = vmatprep.subr.mxu0 0.0
    %598 = vmatpush1.msra.mxu0 0.0
    %599 = vmatprep.subr.mxu0 0.0
    %600 = vmatpush1.msra.mxu0 0.0
    %601 = vmatprep.subr.mxu0 0.0
    %602 = vmatpush1.msra.mxu0 0.0
    %603 = vmatprep.subr.mxu0 0.0
    %604 = vmatpush1.msra.mxu0 0.0
    %605 = vmatprep.subr.mxu0 0.0
    %606 = vmatpush1.msra.mxu0 0.0
    %607 = vmatprep.subr.mxu0 0.0
    %608 = vmatpush1.msra.mxu0 0.0
    %609 = vmatprep.mubr.f32.mxu0 0.0
    %610 = vmatmul.mubr.f32.gmra.mrb[0].mxu0 %v439
    %v611 = vpop.f32.mrb[0].mxu0
    %v612 = vadd.f32 %v274, %v611
    %v613 = vpop.f32.mrb[0].mxu0
    %v614 = vadd.f32 %v276, %v613
    %615 = vmatprep.mubr.f32.mxu0 0.0
    %616 = vmatmul.mubr.f32.gmra.mrb[0].mxu0 %v442
    %v617 = vpop.f32.mrb[0].mxu0
    %v618 = vadd.f32 %v280, %v617
    %v619 = vpop.f32.mrb[0].mxu0
    %v620 = vadd.f32 %v282, %v619
    %621 = vdwg.mxu0
    %622 = vmatprep.subr.mxu0 %v460
    %623 = vmatpush1.msra.mxu0 %v457
    %624 = vmatprep.subr.mxu0 0.0
    %625 = vmatpush1.msra.mxu0 0.0
    %626 = vmatprep.subr.mxu0 0.0
    %627 = vmatpush1.msra.mxu0 0.0
    %628 = vmatprep.subr.mxu0 0.0
    %629 = vmatpush1.msra.mxu0 0.0
    %630 = vmatprep.subr.mxu0 0.0
    %631 = vmatpush1.msra.mxu0 0.0
    %632 = vmatprep.subr.mxu0 0.0
    %633 = vmatpush1.msra.mxu0 0.0
    %634 = vmatprep.subr.mxu0 0.0
    %635 = vmatpush1.msra.mxu0 0.0
    %636 = vmatprep.subr.mxu0 0.0
    %637 = vmatpush1.msra.mxu0 0.0
    %638 = vmatprep.subr.mxu0 0.0
    %639 = vmatpush1.msra.mxu0 0.0
    %640 = vmatprep.subr.mxu0 0.0
    %641 = vmatpush1.msra.mxu0 0.0
    %642 = vmatprep.subr.mxu0 0.0
    %643 = vmatpush1.msra.mxu0 0.0
    %644 = vmatprep.subr.mxu0 0.0
    %645 = vmatpush1.msra.mxu0 0.0
    %646 = vmatprep.subr.mxu0 0.0
    %647 = vmatpush1.msra.mxu0 0.0
    %648 = vmatprep.subr.mxu0 0.0
    %649 = vmatpush1.msra.mxu0 0.0
    %650 = vmatprep.subr.mxu0 0.0
    %651 = vmatpush1.msra.mxu0 0.0
    %652 = vmatprep.subr.mxu0 0.0
    %653 = vmatpush1.msra.mxu0 0.0
    %654 = vmatprep.subr.mxu0 0.0
    %655 = vmatpush1.msra.mxu0 0.0
    %656 = vmatprep.subr.mxu0 0.0
    %657 = vmatpush1.msra.mxu0 0.0
    %658 = vmatprep.subr.mxu0 0.0
    %659 = vmatpush1.msra.mxu0 0.0
    %660 = vmatprep.subr.mxu0 0.0
    %661 = vmatpush1.msra.mxu0 0.0
    %662 = vmatprep.subr.mxu0 0.0
    %663 = vmatpush1.msra.mxu0 0.0
    %664 = vmatprep.subr.mxu0 0.0
    %665 = vmatpush1.msra.mxu0 0.0
    %666 = vmatprep.subr.mxu0 0.0
    %667 = vmatpush1.msra.mxu0 0.0
    %668 = vmatprep.subr.mxu0 0.0
    %669 = vmatpush1.msra.mxu0 0.0
    %670 = vmatprep.subr.mxu0 0.0
    %671 = vmatpush1.msra.mxu0 0.0
    %672 = vmatprep.subr.mxu0 0.0
    %673 = vmatpush1.msra.mxu0 0.0
    %674 = vmatprep.subr.mxu0 0.0
    %675 = vmatpush1.msra.mxu0 0.0
    %676 = vmatprep.subr.mxu0 0.0
    %677 = vmatpush1.msra.mxu0 0.0
    %678 = vmatprep.subr.mxu0 0.0
    %679 = vmatpush1.msra.mxu0 0.0
    %680 = vmatprep.subr.mxu0 0.0
    %681 = vmatpush1.msra.mxu0 0.0
    %682 = vmatprep.subr.mxu0 0.0
    %683 = vmatpush1.msra.mxu0 0.0
    %684 = vmatprep.subr.mxu0 0.0
    %685 = vmatpush1.msra.mxu0 0.0
    %686 = vmatprep.mubr.f32.mxu0 0.0
    %687 = vmatmul.mubr.f32.gmra.mrb[0].mxu0 %v439
    %v688 = vpop.f32.mrb[0].mxu0
    %v689 = vadd.f32 %v351, %v688
    %v690 = vpop.f32.mrb[0].mxu0
    %v691 = vadd.f32 %v353, %v690
    %692 = vmatprep.mubr.f32.mxu0 0.0
    %693 = vmatmul.mubr.f32.gmra.mrb[0].mxu0 %v442
    %v694 = vpop.f32.mrb[0].mxu0
    %v695 = vadd.f32 %v357, %v694
    %v696 = vpop.f32.mrb[0].mxu0
    %v697 = vadd.f32 %v359, %v696
    %698 = vdwg.mxu0
    %699 = vmatprep.subr.mxu0 %v466
    %700 = vmatpush1.msra.mxu0 %v463
    %701 = vmatprep.subr.mxu0 0.0
    %702 = vmatpush1.msra.mxu0 0.0
    %703 = vmatprep.subr.mxu0 0.0
    %704 = vmatpush1.msra.mxu0 0.0
    %705 = vmatprep.subr.mxu0 0.0
    %706 = vmatpush1.msra.mxu0 0.0
    %707 = vmatprep.subr.mxu0 0.0
    %708 = vmatpush1.msra.mxu0 0.0
    %709 = vmatprep.subr.mxu0 0.0
    %710 = vmatpush1.msra.mxu0 0.0
    %711 = vmatprep.subr.mxu0 0.0
    %712 = vmatpush1.msra.mxu0 0.0
    %713 = vmatprep.subr.mxu0 0.0
    %714 = vmatpush1.msra.mxu0 0.0
    %715 = vmatprep.subr.mxu0 0.0
    %716 = vmatpush1.msra.mxu0 0.0
    %717 = vmatprep.subr.mxu0 0.0
    %718 = vmatpush1.msra.mxu0 0.0
    %719 = vmatprep.subr.mxu0 0.0
    %720 = vmatpush1.msra.mxu0 0.0
    %721 = vmatprep.subr.mxu0 0.0
    %722 = vmatpush1.msra.mxu0 0.0
    %723 = vmatprep.subr.mxu0 0.0
    %724 = vmatpush1.msra.mxu0 0.0
    %725 = vmatprep.subr.mxu0 0.0
    %726 = vmatpush1.msra.mxu0 0.0
    %727 = vmatprep.subr.mxu0 0.0
    %728 = vmatpush1.msra.mxu0 0.0
    %729 = vmatprep.subr.mxu0 0.0
    %730 = vmatpush1.msra.mxu0 0.0
    %731 = vmatprep.subr.mxu0 0.0
    %732 = vmatpush1.msra.mxu0 0.0
    %733 = vmatprep.subr.mxu0 0.0
    %734 = vmatpush1.msra.mxu0 0.0
    %735 = vmatprep.subr.mxu0 0.0
    %736 = vmatpush1.msra.mxu0 0.0
    %737 = vmatprep.subr.mxu0 0.0
    %738 = vmatpush1.msra.mxu0 0.0
    %739 = vmatprep.subr.mxu0 0.0
    %740 = vmatpush1.msra.mxu0 0.0
    %741 = vmatprep.subr.mxu0 0.0
    %742 = vmatpush1.msra.mxu0 0.0
    %743 = vmatprep.subr.mxu0 0.0
    %744 = vmatpush1.msra.mxu0 0.0
    %745 = vmatprep.subr.mxu0 0.0
    %746 = vmatpush1.msra.mxu0 0.0
    %747 = vmatprep.subr.mxu0 0.0
    %748 = vmatpush1.msra.mxu0 0.0
    %749 = vmatprep.subr.mxu0 0.0
    %750 = vmatpush1.msra.mxu0 0.0
    %751 = vmatprep.subr.mxu0 0.0
    %752 = vmatpush1.msra.mxu0 0.0
    %753 = vmatprep.subr.mxu0 0.0
    %754 = vmatpush1.msra.mxu0 0.0
    %755 = vmatprep.subr.mxu0 0.0
    %756 = vmatpush1.msra.mxu0 0.0
    %757 = vmatprep.subr.mxu0 0.0
    %758 = vmatpush1.msra.mxu0 0.0
    %759 = vmatprep.subr.mxu0 0.0
    %760 = vmatpush1.msra.mxu0 0.0
    %761 = vmatprep.subr.mxu0 0.0
    %762 = vmatpush1.msra.mxu0 0.0
    %763 = vmatprep.mubr.f32.mxu0 0.0
    %764 = vmatmul.mubr.f32.gmra.mrb[0].mxu0 %v439
    %v765 = vpop.f32.mrb[0].mxu0
    %v766 = vadd.f32 %v428, %v765
    %v767 = vpop.f32.mrb[0].mxu0
    %v768 = vadd.f32 %v430, %v767
    %769 = vmatprep.mubr.f32.mxu0 0.0
    %770 = vmatmul.mubr.f32.gmra.mrb[0].mxu0 %v442
    %v771 = vpop.f32.mrb[0].mxu0
    %v772 = vadd.f32 %v434, %v771
    %v773 = vpop.f32.mrb[0].mxu0
    %v774 = vadd.f32 %v436, %v773
    %775 = vdwg.mxu0
    %v776 = vld [vmem:[%s0 + $0x2] sm:$0xff]
    %v777 = vld [vmem:[%s0 + $0xc] sm:$0xff]
    %v778 = vld [vmem:[#allocation4 + $0x40] sm:$0xf]
    %v779 = vld [vmem:[#allocation4 + $0x48] sm:$0xf]
    %v780 = vld [vmem:[#allocation4 + $0x50] sm:$0xf]
    %v781 = vld [vmem:[#allocation4 + $0x58] sm:$0xf]
    %v782 = vld [vmem:[#allocation4 + $0x60] sm:$0xf]
    %v783 = vld [vmem:[#allocation4 + $0x68] sm:$0xf]
    %v784 = vld [vmem:[#allocation4 + $0x70] sm:$0xf]
    %v785 = vld [vmem:[#allocation4 + $0x78] sm:$0xf]
    %v787 = vsel %vm106, %v776, 0
    %v790 = vsel %vm106, %v777, 0
    %v793 = vsel %vm113, %v778, 0
    %v796 = vsel %vm113, %v779, 0
    %v799 = vsel %vm113, %v780, 0
    %v802 = vsel %vm113, %v781, 0
    %v805 = vsel %vm113, %v782, 0
    %v808 = vsel %vm113, %v783, 0
    %v811 = vsel %vm113, %v784, 0
    %v814 = vsel %vm113, %v785, 0
    %816 = vmatprep.subr.mxu0 %v796
    %817 = vmatpush1.msra.mxu0 %v793
    %818 = vmatprep.subr.mxu0 0.0
    %819 = vmatpush1.msra.mxu0 0.0
    %820 = vmatprep.subr.mxu0 0.0
    %821 = vmatpush1.msra.mxu0 0.0
    %822 = vmatprep.subr.mxu0 0.0
    %823 = vmatpush1.msra.mxu0 0.0
    %824 = vmatprep.subr.mxu0 0.0
    %825 = vmatpush1.msra.mxu0 0.0
    %826 = vmatprep.subr.mxu0 0.0
    %827 = vmatpush1.msra.mxu0 0.0
    %828 = vmatprep.subr.mxu0 0.0
    %829 = vmatpush1.msra.mxu0 0.0
    %830 = vmatprep.subr.mxu0 0.0
    %831 = vmatpush1.msra.mxu0 0.0
    %832 = vmatprep.subr.mxu0 0.0
    %833 = vmatpush1.msra.mxu0 0.0
    %834 = vmatprep.subr.mxu0 0.0
    %835 = vmatpush1.msra.mxu0 0.0
    %836 = vmatprep.subr.mxu0 0.0
    %837 = vmatpush1.msra.mxu0 0.0
    %838 = vmatprep.subr.mxu0 0.0
    %839 = vmatpush1.msra.mxu0 0.0
    %840 = vmatprep.subr.mxu0 0.0
    %841 = vmatpush1.msra.mxu0 0.0
    %842 = vmatprep.subr.mxu0 0.0
    %843 = vmatpush1.msra.mxu0 0.0
    %844 = vmatprep.subr.mxu0 0.0
    %845 = vmatpush1.msra.mxu0 0.0
    %846 = vmatprep.subr.mxu0 0.0
    %847 = vmatpush1.msra.mxu0 0.0
    %848 = vmatprep.subr.mxu0 0.0
    %849 = vmatpush1.msra.mxu0 0.0
    %850 = vmatprep.subr.mxu0 0.0
    %851 = vmatpush1.msra.mxu0 0.0
    %852 = vmatprep.subr.mxu0 0.0
    %853 = vmatpush1.msra.mxu0 0.0
    %854 = vmatprep.subr.mxu0 0.0
    %855 = vmatpush1.msra.mxu0 0.0
    %856 = vmatprep.subr.mxu0 0.0
    %857 = vmatpush1.msra.mxu0 0.0
    %858 = vmatprep.subr.mxu0 0.0
    %859 = vmatpush1.msra.mxu0 0.0
    %860 = vmatprep.subr.mxu0 0.0
    %861 = vmatpush1.msra.mxu0 0.0
    %862 = vmatprep.subr.mxu0 0.0
    %863 = vmatpush1.msra.mxu0 0.0
    %864 = vmatprep.subr.mxu0 0.0
    %865 = vmatpush1.msra.mxu0 0.0
    %866 = vmatprep.subr.mxu0 0.0
    %867 = vmatpush1.msra.mxu0 0.0
    %868 = vmatprep.subr.mxu0 0.0
    %869 = vmatpush1.msra.mxu0 0.0
    %870 = vmatprep.subr.mxu0 0.0
    %871 = vmatpush1.msra.mxu0 0.0
    %872 = vmatprep.subr.mxu0 0.0
    %873 = vmatpush1.msra.mxu0 0.0
    %874 = vmatprep.subr.mxu0 0.0
    %875 = vmatpush1.msra.mxu0 0.0
    %876 = vmatprep.subr.mxu0 0.0
    %877 = vmatpush1.msra.mxu0 0.0
    %878 = vmatprep.subr.mxu0 0.0
    %879 = vmatpush1.msra.mxu0 0.0
    %880 = vmatprep.mubr.f32.mxu0 0.0
    %881 = vmatmul.mubr.f32.gmra.mrb[0].mxu0 %v787
    %v882 = vpop.f32.mrb[0].mxu0
    %v883 = vadd.f32 0.0, %v882
    %v884 = vpop.f32.mrb[0].mxu0
    %v885 = vadd.f32 0.0, %v884
    %886 = vmatprep.mubr.f32.mxu0 0.0
    %887 = vmatmul.mubr.f32.gmra.mrb[0].mxu0 %v790
    %v888 = vpop.f32.mrb[0].mxu0
    %v889 = vadd.f32 0.0, %v888
    %v890 = vpop.f32.mrb[0].mxu0
    %v891 = vadd.f32 0.0, %v890
    %892 = vdwg.mxu0
    %893 = vmatprep.subr.mxu0 %v802
    %894 = vmatpush1.msra.mxu0 %v799
    %895 = vmatprep.subr.mxu0 0.0
    %896 = vmatpush1.msra.mxu0 0.0
    %897 = vmatprep.subr.mxu0 0.0
    %898 = vmatpush1.msra.mxu0 0.0
    %899 = vmatprep.subr.mxu0 0.0
    %900 = vmatpush1.msra.mxu0 0.0
    %901 = vmatprep.subr.mxu0 0.0
    %902 = vmatpush1.msra.mxu0 0.0
    %903 = vmatprep.subr.mxu0 0.0
    %904 = vmatpush1.msra.mxu0 0.0
    %905 = vmatprep.subr.mxu0 0.0
    %906 = vmatpush1.msra.mxu0 0.0
    %907 = vmatprep.subr.mxu0 0.0
    %908 = vmatpush1.msra.mxu0 0.0
    %909 = vmatprep.subr.mxu0 0.0
    %910 = vmatpush1.msra.mxu0 0.0
    %911 = vmatprep.subr.mxu0 0.0
    %912 = vmatpush1.msra.mxu0 0.0
    %913 = vmatprep.subr.mxu0 0.0
    %914 = vmatpush1.msra.mxu0 0.0
    %915 = vmatprep.subr.mxu0 0.0
    %916 = vmatpush1.msra.mxu0 0.0
    %917 = vmatprep.subr.mxu0 0.0
    %918 = vmatpush1.msra.mxu0 0.0
    %919 = vmatprep.subr.mxu0 0.0
    %920 = vmatpush1.msra.mxu0 0.0
    %921 = vmatprep.subr.mxu0 0.0
    %922 = vmatpush1.msra.mxu0 0.0
    %923 = vmatprep.subr.mxu0 0.0
    %924 = vmatpush1.msra.mxu0 0.0
    %925 = vmatprep.subr.mxu0 0.0
    %926 = vmatpush1.msra.mxu0 0.0
    %927 = vmatprep.subr.mxu0 0.0
    %928 = vmatpush1.msra.mxu0 0.0
    %929 = vmatprep.subr.mxu0 0.0
    %930 = vmatpush1.msra.mxu0 0.0
    %931 = vmatprep.subr.mxu0 0.0
    %932 = vmatpush1.msra.mxu0 0.0
    %933 = vmatprep.subr.mxu0 0.0
    %934 = vmatpush1.msra.mxu0 0.0
    %935 = vmatprep.subr.mxu0 0.0
    %936 = vmatpush1.msra.mxu0 0.0
    %937 = vmatprep.subr.mxu0 0.0
    %938 = vmatpush1.msra.mxu0 0.0
    %939 = vmatprep.subr.mxu0 0.0
    %940 = vmatpush1.msra.mxu0 0.0
    %941 = vmatprep.subr.mxu0 0.0
    %942 = vmatpush1.msra.mxu0 0.0
    %943 = vmatprep.subr.mxu0 0.0
    %944 = vmatpush1.msra.mxu0 0.0
    %945 = vmatprep.subr.mxu0 0.0
    %946 = vmatpush1.msra.mxu0 0.0
    %947 = vmatprep.subr.mxu0 0.0
    %948 = vmatpush1.msra.mxu0 0.0
    %949 = vmatprep.subr.mxu0 0.0
    %950 = vmatpush1.msra.mxu0 0.0
    %951 = vmatprep.subr.mxu0 0.0
    %952 = vmatpush1.msra.mxu0 0.0
    %953 = vmatprep.subr.mxu0 0.0
    %954 = vmatpush1.msra.mxu0 0.0
    %955 = vmatprep.subr.mxu0 0.0
    %956 = vmatpush1.msra.mxu0 0.0
    %957 = vmatprep.mubr.f32.mxu0 0.0
    %958 = vmatmul.mubr.f32.gmra.mrb[0].mxu0 %v787
    %v959 = vpop.f32.mrb[0].mxu0
    %v960 = vadd.f32 0.0, %v959
    %v961 = vpop.f32.mrb[0].mxu0
    %v962 = vadd.f32 0.0, %v961
    %963 = vmatprep.mubr.f32.mxu0 0.0
    %964 = vmatmul.mubr.f32.gmra.mrb[0].mxu0 %v790
    %v965 = vpop.f32.mrb[0].mxu0
    %v966 = vadd.f32 0.0, %v965
    %v967 = vpop.f32.mrb[0].mxu0
    %v968 = vadd.f32 0.0, %v967
    %969 = vdwg.mxu0
    %970 = vmatprep.subr.mxu0 %v808
    %971 = vmatpush1.msra.mxu0 %v805
    %972 = vmatprep.subr.mxu0 0.0
    %973 = vmatpush1.msra.mxu0 0.0
    %974 = vmatprep.subr.mxu0 0.0
    %975 = vmatpush1.msra.mxu0 0.0
    %976 = vmatprep.subr.mxu0 0.0
    %977 = vmatpush1.msra.mxu0 0.0
    %978 = vmatprep.subr.mxu0 0.0
    %979 = vmatpush1.msra.mxu0 0.0
    %980 = vmatprep.subr.mxu0 0.0
    %981 = vmatpush1.msra.mxu0 0.0
    %982 = vmatprep.subr.mxu0 0.0
    %983 = vmatpush1.msra.mxu0 0.0
    %984 = vmatprep.subr.mxu0 0.0
    %985 = vmatpush1.msra.mxu0 0.0
    %986 = vmatprep.subr.mxu0 0.0
    %987 = vmatpush1.msra.mxu0 0.0
    %988 = vmatprep.subr.mxu0 0.0
    %989 = vmatpush1.msra.mxu0 0.0
    %990 = vmatprep.subr.mxu0 0.0
    %991 = vmatpush1.msra.mxu0 0.0
    %992 = vmatprep.subr.mxu0 0.0
    %993 = vmatpush1.msra.mxu0 0.0
    %994 = vmatprep.subr.mxu0 0.0
    %995 = vmatpush1.msra.mxu0 0.0
    %996 = vmatprep.subr.mxu0 0.0
    %997 = vmatpush1.msra.mxu0 0.0
    %998 = vmatprep.subr.mxu0 0.0
    %999 = vmatpush1.msra.mxu0 0.0
    %1000 = vmatprep.subr.mxu0 0.0
    %1001 = vmatpush1.msra.mxu0 0.0
    %1002 = vmatprep.subr.mxu0 0.0
    %1003 = vmatpush1.msra.mxu0 0.0
    %1004 = vmatprep.subr.mxu0 0.0
    %1005 = vmatpush1.msra.mxu0 0.0
    %1006 = vmatprep.subr.mxu0 0.0
    %1007 = vmatpush1.msra.mxu0 0.0
    %1008 = vmatprep.subr.mxu0 0.0
    %1009 = vmatpush1.msra.mxu0 0.0
    %1010 = vmatprep.subr.mxu0 0.0
    %1011 = vmatpush1.msra.mxu0 0.0
    %1012 = vmatprep.subr.mxu0 0.0
    %1013 = vmatpush1.msra.mxu0 0.0
    %1014 = vmatprep.subr.mxu0 0.0
    %1015 = vmatpush1.msra.mxu0 0.0
    %1016 = vmatprep.subr.mxu0 0.0
    %1017 = vmatpush1.msra.mxu0 0.0
    %1018 = vmatprep.subr.mxu0 0.0
    %1019 = vmatpush1.msra.mxu0 0.0
    %1020 = vmatprep.subr.mxu0 0.0
    %1021 = vmatpush1.msra.mxu0 0.0
    %1022 = vmatprep.subr.mxu0 0.0
    %1023 = vmatpush1.msra.mxu0 0.0
    %1024 = vmatprep.subr.mxu0 0.0
    %1025 = vmatpush1.msra.mxu0 0.0
    %1026 = vmatprep.subr.mxu0 0.0
    %1027 = vmatpush1.msra.mxu0 0.0
    %1028 = vmatprep.subr.mxu0 0.0
    %1029 = vmatpush1.msra.mxu0 0.0
    %1030 = vmatprep.subr.mxu0 0.0
    %1031 = vmatpush1.msra.mxu0 0.0
    %1032 = vmatprep.subr.mxu0 0.0
    %1033 = vmatpush1.msra.mxu0 0.0
    %1034 = vmatprep.mubr.f32.mxu0 0.0
    %1035 = vmatmul.mubr.f32.gmra.mrb[0].mxu0 %v787
    %v1036 = vpop.f32.mrb[0].mxu0
    %v1037 = vadd.f32 0.0, %v1036
    %v1038 = vpop.f32.mrb[0].mxu0
    %v1039 = vadd.f32 0.0, %v1038
    %1040 = vmatprep.mubr.f32.mxu0 0.0
    %1041 = vmatmul.mubr.f32.gmra.mrb[0].mxu0 %v790
    %v1042 = vpop.f32.mrb[0].mxu0
    %v1043 = vadd.f32 0.0, %v1042
    %v1044 = vpop.f32.mrb[0].mxu0
    %v1045 = vadd.f32 0.0, %v1044
    %1046 = vdwg.mxu0
    %1047 = vmatprep.subr.mxu0 %v814
    %1048 = vmatpush1.msra.mxu0 %v811
    %1049 = vmatprep.subr.mxu0 0.0
    %1050 = vmatpush1.msra.mxu0 0.0
    %1051 = vmatprep.subr.mxu0 0.0
    %1052 = vmatpush1.msra.mxu0 0.0
    %1053 = vmatprep.subr.mxu0 0.0
    %1054 = vmatpush1.msra.mxu0 0.0
    %1055 = vmatprep.subr.mxu0 0.0
    %1056 = vmatpush1.msra.mxu0 0.0
    %1057 = vmatprep.subr.mxu0 0.0
    %1058 = vmatpush1.msra.mxu0 0.0
    %1059 = vmatprep.subr.mxu0 0.0
    %1060 = vmatpush1.msra.mxu0 0.0
    %1061 = vmatprep.subr.mxu0 0.0
    %1062 = vmatpush1.msra.mxu0 0.0
    %1063 = vmatprep.subr.mxu0 0.0
    %1064 = vmatpush1.msra.mxu0 0.0
    %1065 = vmatprep.subr.mxu0 0.0
    %1066 = vmatpush1.msra.mxu0 0.0
    %1067 = vmatprep.subr.mxu0 0.0
    %1068 = vmatpush1.msra.mxu0 0.0
    %1069 = vmatprep.subr.mxu0 0.0
    %1070 = vmatpush1.msra.mxu0 0.0
    %1071 = vmatprep.subr.mxu0 0.0
    %1072 = vmatpush1.msra.mxu0 0.0
    %1073 = vmatprep.subr.mxu0 0.0
    %1074 = vmatpush1.msra.mxu0 0.0
    %1075 = vmatprep.subr.mxu0 0.0
    %1076 = vmatpush1.msra.mxu0 0.0
    %1077 = vmatprep.subr.mxu0 0.0
    %1078 = vmatpush1.msra.mxu0 0.0
    %1079 = vmatprep.subr.mxu0 0.0
    %1080 = vmatpush1.msra.mxu0 0.0
    %1081 = vmatprep.subr.mxu0 0.0
    %1082 = vmatpush1.msra.mxu0 0.0
    %1083 = vmatprep.subr.mxu0 0.0
    %1084 = vmatpush1.msra.mxu0 0.0
    %1085 = vmatprep.subr.mxu0 0.0
    %1086 = vmatpush1.msra.mxu0 0.0
    %1087 = vmatprep.subr.mxu0 0.0
    %1088 = vmatpush1.msra.mxu0 0.0
    %1089 = vmatprep.subr.mxu0 0.0
    %1090 = vmatpush1.msra.mxu0 0.0
    %1091 = vmatprep.subr.mxu0 0.0
    %1092 = vmatpush1.msra.mxu0 0.0
    %1093 = vmatprep.subr.mxu0 0.0
    %1094 = vmatpush1.msra.mxu0 0.0
    %1095 = vmatprep.subr.mxu0 0.0
    %1096 = vmatpush1.msra.mxu0 0.0
    %1097 = vmatprep.subr.mxu0 0.0
    %1098 = vmatpush1.msra.mxu0 0.0
    %1099 = vmatprep.subr.mxu0 0.0
    %1100 = vmatpush1.msra.mxu0 0.0
    %1101 = vmatprep.subr.mxu0 0.0
    %1102 = vmatpush1.msra.mxu0 0.0
    %1103 = vmatprep.subr.mxu0 0.0
    %1104 = vmatpush1.msra.mxu0 0.0
    %1105 = vmatprep.subr.mxu0 0.0
    %1106 = vmatpush1.msra.mxu0 0.0
    %1107 = vmatprep.subr.mxu0 0.0
    %1108 = vmatpush1.msra.mxu0 0.0
    %1109 = vmatprep.subr.mxu0 0.0
    %1110 = vmatpush1.msra.mxu0 0.0
    %1111 = vmatprep.mubr.f32.mxu0 0.0
    %1112 = vmatmul.mubr.f32.gmra.mrb[0].mxu0 %v787
    %v1113 = vpop.f32.mrb[0].mxu0
    %v1114 = vadd.f32 0.0, %v1113
    %v1115 = vpop.f32.mrb[0].mxu0
    %v1116 = vadd.f32 0.0, %v1115
    %1117 = vmatprep.mubr.f32.mxu0 0.0
    %1118 = vmatmul.mubr.f32.gmra.mrb[0].mxu0 %v790
    %v1119 = vpop.f32.mrb[0].mxu0
    %v1120 = vadd.f32 0.0, %v1119
    %v1121 = vpop.f32.mrb[0].mxu0
    %v1122 = vadd.f32 0.0, %v1121
    %1123 = vdwg.mxu0
    %v1124 = vadd.f32 %v535, %v883
    %v1125 = vadd.f32 %v537, %v885
    %v1126 = vadd.f32 %v612, %v960
    %v1127 = vadd.f32 %v614, %v962
    %v1128 = vadd.f32 %v689, %v1037
    %v1129 = vadd.f32 %v691, %v1039
    %v1130 = vadd.f32 %v766, %v1114
    %v1131 = vadd.f32 %v768, %v1116
    %v1132 = vadd.f32 %v541, %v889
    %v1133 = vadd.f32 %v543, %v891
    %v1134 = vadd.f32 %v618, %v966
    %v1135 = vadd.f32 %v620, %v968
    %v1136 = vadd.f32 %v695, %v1043
    %v1137 = vadd.f32 %v697, %v1045
    %v1138 = vadd.f32 %v772, %v1120
    %v1139 = vadd.f32 %v774, %v1122
    %v1140 = vld [vmem:[%s2] sm:$0xff]
    %v1142 = vlaneseq
    %v1143 = vshrl.u32 %v1142, 7
    %v1144 = vsub.s32 0, %v1143
    %v1145 = vrot.slane %v1140, %v1144
    %v1146 = vlaneseq
    %v1147 = vshrl.u32 %v1146, 7
    %v1148 = vsub.s32 1, %v1147
    %v1149 = vrot.slane %v1140, %v1148
    %v1150 = vlaneseq
    %v1151 = vshrl.u32 %v1150, 7
    %v1152 = vsub.s32 2, %v1151
    %v1153 = vrot.slane %v1140, %v1152
    %v1154 = vlaneseq
    %v1155 = vshrl.u32 %v1154, 7
    %v1156 = vsub.s32 3, %v1155
    %v1157 = vrot.slane %v1140, %v1156
    %v1158 = vlaneseq
    %v1159 = vshrl.u32 %v1158, 7
    %v1160 = vsub.s32 4, %v1159
    %v1161 = vrot.slane %v1140, %v1160
    %v1162 = vlaneseq
    %v1163 = vshrl.u32 %v1162, 7
    %v1164 = vsub.s32 5, %v1163
    %v1165 = vrot.slane %v1140, %v1164
    %v1166 = vlaneseq
    %v1167 = vshrl.u32 %v1166, 7
    %v1168 = vsub.s32 6, %v1167
    %v1169 = vrot.slane %v1140, %v1168
    %v1170 = vlaneseq
    %v1171 = vshrl.u32 %v1170, 7
    %v1172 = vsub.s32 7, %v1171
    %v1173 = vrot.slane %v1140, %v1172
    %v1182 = vadd.f32 %v1124, %v1145
    %v1183 = vadd.f32 %v1125, %v1149
    %v1184 = vadd.f32 %v1126, %v1153
    %v1185 = vadd.f32 %v1127, %v1157
    %v1186 = vadd.f32 %v1128, %v1161
    %v1187 = vadd.f32 %v1129, %v1165
    %v1188 = vadd.f32 %v1130, %v1169
    %v1189 = vadd.f32 %v1131, %v1173
    %v1190 = vadd.f32 %v1132, %v1145
    %v1191 = vadd.f32 %v1133, %v1149
    %v1192 = vadd.f32 %v1134, %v1153
    %v1193 = vadd.f32 %v1135, %v1157
    %v1194 = vadd.f32 %v1136, %v1161
    %v1195 = vadd.f32 %v1137, %v1165
    %v1196 = vadd.f32 %v1138, %v1169
    %v1197 = vadd.f32 %v1139, %v1173
    %v1198 = vld [vmem:[#allocation6] sm:$0xff]
    %v1199 = vld [vmem:[#allocation6 + $0x8] sm:$0xff]
    %v1200 = vld [vmem:[#allocation6 + $0x10] sm:$0xff]
    %v1201 = vld [vmem:[#allocation6 + $0x18] sm:$0xff]
    %v1202 = vld [vmem:[#allocation6 + $0x20] sm:$0xff]
    %v1203 = vld [vmem:[#allocation6 + $0x28] sm:$0xff]
    %v1204 = vld [vmem:[#allocation6 + $0x30] sm:$0xff]
    %v1205 = vld [vmem:[#allocation6 + $0x38] sm:$0xff]
    %v1206 = vld [vmem:[#allocation6 + $0x40] sm:$0xff]
    %v1207 = vld [vmem:[#allocation6 + $0x48] sm:$0xff]
    %v1208 = vld [vmem:[#allocation6 + $0x50] sm:$0xff]
    %v1209 = vld [vmem:[#allocation6 + $0x58] sm:$0xff]
    %v1210 = vld [vmem:[#allocation6 + $0x60] sm:$0xff]
    %v1211 = vld [vmem:[#allocation6 + $0x68] sm:$0xff]
    %v1212 = vld [vmem:[#allocation6 + $0x70] sm:$0xff]
    %v1213 = vld [vmem:[#allocation6 + $0x78] sm:$0xff]
    %v1214 = vld [vmem:[#allocation6 + $0x80] sm:$0xff]
    %v1215 = vld [vmem:[#allocation6 + $0x88] sm:$0xff]
    %v1216 = vld [vmem:[#allocation6 + $0x90] sm:$0xff]
    %v1217 = vld [vmem:[#allocation6 + $0x98] sm:$0xff]
    %v1218 = vld [vmem:[#allocation6 + $0xa0] sm:$0xff]
    %v1219 = vld [vmem:[#allocation6 + $0xa8] sm:$0xff]
    %v1220 = vld [vmem:[#allocation6 + $0xb0] sm:$0xff]
    %v1221 = vld [vmem:[#allocation6 + $0xb8] sm:$0xff]
    %v1222 = vld [vmem:[#allocation6 + $0xc0] sm:$0xff]
    %v1223 = vld [vmem:[#allocation6 + $0xc8] sm:$0xff]
    %v1224 = vld [vmem:[#allocation6 + $0xd0] sm:$0xff]
    %v1225 = vld [vmem:[#allocation6 + $0xd8] sm:$0xff]
    %v1226 = vld [vmem:[#allocation6 + $0xe0] sm:$0xff]
    %v1227 = vld [vmem:[#allocation6 + $0xe8] sm:$0xff]
    %v1228 = vld [vmem:[#allocation6 + $0xf0] sm:$0xff]
    %v1229 = vld [vmem:[#allocation6 + $0xf8] sm:$0xff]
    %v1262 = vunpack.c.l.b16 %v1198
    %v1263 = vunpack.c.h.b16 %v1198
    %v1264 = vunpack.c.l.b16 %v1199
    %v1265 = vunpack.c.h.b16 %v1199
    %v1266 = vunpack.c.l.b16 %v1200
    %v1267 = vunpack.c.h.b16 %v1200
    %v1268 = vunpack.c.l.b16 %v1201
    %v1269 = vunpack.c.h.b16 %v1201
    %v1270 = vunpack.c.l.b16 %v1202
    %v1271 = vunpack.c.h.b16 %v1202
    %v1272 = vunpack.c.l.b16 %v1203
    %v1273 = vunpack.c.h.b16 %v1203
    %v1274 = vunpack.c.l.b16 %v1204
    %v1275 = vunpack.c.h.b16 %v1204
    %v1276 = vunpack.c.l.b16 %v1205
    %v1277 = vunpack.c.h.b16 %v1205
    %v1278 = vunpack.c.l.b16 %v1206
    %v1279 = vunpack.c.h.b16 %v1206
    %v1280 = vunpack.c.l.b16 %v1207
    %v1281 = vunpack.c.h.b16 %v1207
    %v1282 = vunpack.c.l.b16 %v1208
    %v1283 = vunpack.c.h.b16 %v1208
    %v1284 = vunpack.c.l.b16 %v1209
    %v1285 = vunpack.c.h.b16 %v1209
    %v1286 = vunpack.c.l.b16 %v1210
    %v1287 = vunpack.c.h.b16 %v1210
    %v1288 = vunpack.c.l.b16 %v1211
    %v1289 = vunpack.c.h.b16 %v1211
    %v1290 = vunpack.c.l.b16 %v1212
    %v1291 = vunpack.c.h.b16 %v1212
    %v1292 = vunpack.c.l.b16 %v1213
    %v1293 = vunpack.c.h.b16 %v1213
    %v1294 = vunpack.c.l.b16 %v1214
    %v1295 = vunpack.c.h.b16 %v1214
    %v1296 = vunpack.c.l.b16 %v1215
    %v1297 = vunpack.c.h.b16 %v1215
    %v1298 = vunpack.c.l.b16 %v1216
    %v1299 = vunpack.c.h.b16 %v1216
    %v1300 = vunpack.c.l.b16 %v1217
    %v1301 = vunpack.c.h.b16 %v1217
    %v1302 = vunpack.c.l.b16 %v1218
    %v1303 = vunpack.c.h.b16 %v1218
    %v1304 = vunpack.c.l.b16 %v1219
    %v1305 = vunpack.c.h.b16 %v1219
    %v1306 = vunpack.c.l.b16 %v1220
    %v1307 = vunpack.c.h.b16 %v1220
    %v1308 = vunpack.c.l.b16 %v1221
    %v1309 = vunpack.c.h.b16 %v1221
    %v1310 = vunpack.c.l.b16 %v1222
    %v1311 = vunpack.c.h.b16 %v1222
    %v1312 = vunpack.c.l.b16 %v1223
    %v1313 = vunpack.c.h.b16 %v1223
    %v1314 = vunpack.c.l.b16 %v1224
    %v1315 = vunpack.c.h.b16 %v1224
    %v1316 = vunpack.c.l.b16 %v1225
    %v1317 = vunpack.c.h.b16 %v1225
    %v1318 = vunpack.c.l.b16 %v1226
    %v1319 = vunpack.c.h.b16 %v1226
    %v1320 = vunpack.c.l.b16 %v1227
    %v1321 = vunpack.c.h.b16 %v1227
    %v1322 = vunpack.c.l.b16 %v1228
    %v1323 = vunpack.c.h.b16 %v1228
    %v1324 = vunpack.c.l.b16 %v1229
    %v1325 = vunpack.c.h.b16 %v1229
    %v1326 = vpack.c.b16 %v1266, %v1262
    %v1327 = vpack.c.b16 %v1267, %v1263
    %v1328 = vpack.c.b16 %v1268, %v1264
    %v1329 = vpack.c.b16 %v1269, %v1265
    %v1330 = vpack.c.b16 %v1274, %v1270
    %v1331 = vpack.c.b16 %v1275, %v1271
    %v1332 = vpack.c.b16 %v1276, %v1272
    %v1333 = vpack.c.b16 %v1277, %v1273
    %v1334 = vpack.c.b16 %v1282, %v1278
    %v1335 = vpack.c.b16 %v1283, %v1279
    %v1336 = vpack.c.b16 %v1284, %v1280
    %v1337 = vpack.c.b16 %v1285, %v1281
    %v1338 = vpack.c.b16 %v1290, %v1286
    %v1339 = vpack.c.b16 %v1291, %v1287
    %v1340 = vpack.c.b16 %v1292, %v1288
    %v1341 = vpack.c.b16 %v1293, %v1289
    %v1342 = vpack.c.b16 %v1298, %v1294
    %v1343 = vpack.c.b16 %v1299, %v1295
    %v1344 = vpack.c.b16 %v1300, %v1296
    %v1345 = vpack.c.b16 %v1301, %v1297
    %v1346 = vpack.c.b16 %v1306, %v1302
    %v1347 = vpack.c.b16 %v1307, %v1303
    %v1348 = vpack.c.b16 %v1308, %v1304
    %v1349 = vpack.c.b16 %v1309, %v1305
    %v1350 = vpack.c.b16 %v1314, %v1310
    %v1351 = vpack.c.b16 %v1315, %v1311
    %v1352 = vpack.c.b16 %v1316, %v1312
    %v1353 = vpack.c.b16 %v1317, %v1313
    %v1354 = vpack.c.b16 %v1322, %v1318
    %v1355 = vpack.c.b16 %v1323, %v1319
    %v1356 = vpack.c.b16 %v1324, %v1320
    %v1357 = vpack.c.b16 %v1325, %v1321
    %1390 = vmatprep.subr.bf16.mxu0 %v1327
    %1391 = vmatpush1.bf16.msra.mxu0 %v1326
    %1392 = vmatprep.subr.bf16.mxu0 %v1331
    %1393 = vmatpush1.bf16.msra.mxu0 %v1330
    %1394 = vmatprep.subr.bf16.mxu0 %v1335
    %1395 = vmatpush1.bf16.msra.mxu0 %v1334
    %1396 = vmatprep.subr.bf16.mxu0 %v1339
    %1397 = vmatpush1.bf16.msra.mxu0 %v1338
    %1398 = vmatprep.subr.bf16.mxu0 %v1343
    %1399 = vmatpush1.bf16.msra.mxu0 %v1342
    %1400 = vmatprep.subr.bf16.mxu0 %v1347
    %1401 = vmatpush1.bf16.msra.mxu0 %v1346
    %1402 = vmatprep.subr.bf16.mxu0 %v1351
    %1403 = vmatpush1.bf16.msra.mxu0 %v1350
    %1404 = vmatprep.subr.bf16.mxu0 %v1355
    %1405 = vmatpush1.bf16.msra.mxu0 %v1354
    %1406 = vmatprep.subr.bf16.mxu0 0
    %1407 = vmatpush1.bf16.msra.mxu0 0
    %1408 = vmatprep.subr.bf16.mxu0 0
    %1409 = vmatpush1.bf16.msra.mxu0 0
    %1410 = vmatprep.subr.bf16.mxu0 0
    %1411 = vmatpush1.bf16.msra.mxu0 0
    %1412 = vmatprep.subr.bf16.mxu0 0
    %1413 = vmatpush1.bf16.msra.mxu0 0
    %1414 = vmatprep.subr.bf16.mxu0 0
    %1415 = vmatpush1.bf16.msra.mxu0 0
    %1416 = vmatprep.subr.bf16.mxu0 0
    %1417 = vmatpush1.bf16.msra.mxu0 0
    %1418 = vmatprep.subr.bf16.mxu0 0
    %1419 = vmatpush1.bf16.msra.mxu0 0
    %1420 = vmatprep.subr.bf16.mxu0 0
    %1421 = vmatpush1.bf16.msra.mxu0 0
    %1422 = vmatprep.mubr.bf16.mxu0 0
    %1423 = vmatmul.mubr.bf16.gmra.mrb[0].mxu0 0
    %v1424 = vpop.f32.mrb[0].mxu0
    %v1425 = vadd.f32 0.0, %v1424
    %v1426 = vpop.f32.mrb[0].mxu0
    %v1427 = vadd.f32 0.0, %v1426
    %v1428 = vpop.f32.mrb[0].mxu0
    %v1429 = vpop.f32.mrb[0].mxu0
    %1430 = vdwg.mxu0
    %1431 = vmatprep.subr.bf16.mxu0 %v1329
    %1432 = vmatpush1.bf16.msra.mxu0 %v1328
    %1433 = vmatprep.subr.bf16.mxu0 %v1333
    %1434 = vmatpush1.bf16.msra.mxu0 %v1332
    %1435 = vmatprep.subr.bf16.mxu0 %v1337
    %1436 = vmatpush1.bf16.msra.mxu0 %v1336
    %1437 = vmatprep.subr.bf16.mxu0 %v1341
    %1438 = vmatpush1.bf16.msra.mxu0 %v1340
    %1439 = vmatprep.subr.bf16.mxu0 %v1345
    %1440 = vmatpush1.bf16.msra.mxu0 %v1344
    %1441 = vmatprep.subr.bf16.mxu0 %v1349
    %1442 = vmatpush1.bf16.msra.mxu0 %v1348
    %1443 = vmatprep.subr.bf16.mxu0 %v1353
    %1444 = vmatpush1.bf16.msra.mxu0 %v1352
    %1445 = vmatprep.subr.bf16.mxu0 %v1357
    %1446 = vmatpush1.bf16.msra.mxu0 %v1356
    %1447 = vmatprep.subr.bf16.mxu0 0
    %1448 = vmatpush1.bf16.msra.mxu0 0
    %1449 = vmatprep.subr.bf16.mxu0 0
    %1450 = vmatpush1.bf16.msra.mxu0 0
    %1451 = vmatprep.subr.bf16.mxu0 0
    %1452 = vmatpush1.bf16.msra.mxu0 0
    %1453 = vmatprep.subr.bf16.mxu0 0
    %1454 = vmatpush1.bf16.msra.mxu0 0
    %1455 = vmatprep.subr.bf16.mxu0 0
    %1456 = vmatpush1.bf16.msra.mxu0 0
    %1457 = vmatprep.subr.bf16.mxu0 0
    %1458 = vmatpush1.bf16.msra.mxu0 0
    %1459 = vmatprep.subr.bf16.mxu0 0
    %1460 = vmatpush1.bf16.msra.mxu0 0
    %1461 = vmatprep.subr.bf16.mxu0 0
    %1462 = vmatpush1.bf16.msra.mxu0 0
    %1463 = vmatprep.mubr.bf16.mxu0 0
    %1464 = vmatmul.mubr.bf16.gmra.mrb[0].mxu0 0
    %v1465 = vpop.f32.mrb[0].mxu0
    %v1466 = vadd.f32 0.0, %v1465
    %v1467 = vpop.f32.mrb[0].mxu0
    %v1468 = vadd.f32 0.0, %v1467
    %v1469 = vpop.f32.mrb[0].mxu0
    %v1470 = vpop.f32.mrb[0].mxu0
    %1471 = vdwg.mxu0
    %v1472 = vadd.f32 %v1182, %v1425
    %v1473 = vadd.f32 %v1183, %v1427
    %v1474 = vadd.f32 %v1184, %v1466
    %v1475 = vadd.f32 %v1185, %v1468
    %v1476 = vxor.u32 %v1472, 2147483648
    %v1477 = vmul.f32 %v1476, 1.442695
    %v1478 = vpow.pop %v1477
    %v1479 = vadd.f32 %v1478, 1.0
    %v1480 = vrcp.pop %v1479
    %v1481 = vmul.f32 1.0, %v1480
    %v1482 = vxor.u32 %v1473, 2147483648
    %v1483 = vmul.f32 %v1482, 1.442695
    %v1484 = vpow.pop %v1483
    %v1485 = vadd.f32 %v1484, 1.0
    %v1486 = vrcp.pop %v1485
    %v1487 = vmul.f32 1.0, %v1486
    %v1488 = vtanh.pop %v1474
    %v1489 = vxor.u32 %v1475, 2147483648
    %v1490 = vmul.f32 %v1489, 1.442695
    %v1491 = vpow.pop %v1490
    %v1492 = vadd.f32 %v1491, 1.0
    %v1493 = vrcp.pop %v1492
    %v1494 = vmul.f32 1.0, %v1493
    %v1495 = vmul.f32 %v1487, 0.0
    %v1496 = vmul.f32 %v1481, %v1488
    %v1497 = vadd.f32 %v1495, %v1496
    %v1498 = vtanh.pop %v1497
    %v1499 = vmul.f32 %v1494, %v1498
    %v1500 = vld [vmem:[#allocation8] sm:$0xff]
    %v1501 = vld [vmem:[#allocation8 + $0x8] sm:$0xff]
    %v1502 = vld [vmem:[#allocation8 + $0x10] sm:$0xff]
    %v1503 = vld [vmem:[#allocation8 + $0x18] sm:$0xff]
    %v1504 = vld [vmem:[#allocation8 + $0x20] sm:$0xff]
    %v1505 = vld [vmem:[#allocation8 + $0x28] sm:$0xff]
    %v1506 = vld [vmem:[#allocation8 + $0x30] sm:$0xff]
    %v1507 = vld [vmem:[#allocation8 + $0x38] sm:$0xff]
    %v1508 = vld [vmem:[#allocation8 + $0x40] sm:$0xff]
    %v1509 = vld [vmem:[#allocation8 + $0x48] sm:$0xff]
    %v1510 = vld [vmem:[#allocation8 + $0x50] sm:$0xff]
    %v1511 = vld [vmem:[#allocation8 + $0x58] sm:$0xff]
    %v1512 = vld [vmem:[#allocation8 + $0x60] sm:$0xff]
    %v1513 = vld [vmem:[#allocation8 + $0x68] sm:$0xff]
    %v1514 = vld [vmem:[#allocation8 + $0x70] sm:$0xff]
    %v1515 = vld [vmem:[#allocation8 + $0x78] sm:$0xff]
    %v1516 = vld [vmem:[#allocation8 + $0x80] sm:$0xff]
    %v1517 = vld [vmem:[#allocation8 + $0x88] sm:$0xff]
    %v1518 = vld [vmem:[#allocation8 + $0x90] sm:$0xff]
    %v1519 = vld [vmem:[#allocation8 + $0x98] sm:$0xff]
    %v1520 = vld [vmem:[#allocation8 + $0xa0] sm:$0xff]
    %v1521 = vld [vmem:[#allocation8 + $0xa8] sm:$0xff]
    %v1522 = vld [vmem:[#allocation8 + $0xb0] sm:$0xff]
    %v1523 = vld [vmem:[#allocation8 + $0xb8] sm:$0xff]
    %v1524 = vld [vmem:[#allocation8 + $0xc0] sm:$0xff]
    %v1525 = vld [vmem:[#allocation8 + $0xc8] sm:$0xff]
    %v1526 = vld [vmem:[#allocation8 + $0xd0] sm:$0xff]
    %v1527 = vld [vmem:[#allocation8 + $0xd8] sm:$0xff]
    %v1528 = vld [vmem:[#allocation8 + $0xe0] sm:$0xff]
    %v1529 = vld [vmem:[#allocation8 + $0xe8] sm:$0xff]
    %v1530 = vld [vmem:[#allocation8 + $0xf0] sm:$0xff]
    %v1531 = vld [vmem:[#allocation8 + $0xf8] sm:$0xff]
    %v1564 = vunpack.c.l.b16 %v1500
    %v1565 = vunpack.c.h.b16 %v1500
    %v1566 = vunpack.c.l.b16 %v1501
    %v1567 = vunpack.c.h.b16 %v1501
    %v1568 = vunpack.c.l.b16 %v1502
    %v1569 = vunpack.c.h.b16 %v1502
    %v1570 = vunpack.c.l.b16 %v1503
    %v1571 = vunpack.c.h.b16 %v1503
    %v1572 = vunpack.c.l.b16 %v1504
    %v1573 = vunpack.c.h.b16 %v1504
    %v1574 = vunpack.c.l.b16 %v1505
    %v1575 = vunpack.c.h.b16 %v1505
    %v1576 = vunpack.c.l.b16 %v1506
    %v1577 = vunpack.c.h.b16 %v1506
    %v1578 = vunpack.c.l.b16 %v1507
    %v1579 = vunpack.c.h.b16 %v1507
    %v1580 = vunpack.c.l.b16 %v1508
    %v1581 = vunpack.c.h.b16 %v1508
    %v1582 = vunpack.c.l.b16 %v1509
    %v1583 = vunpack.c.h.b16 %v1509
    %v1584 = vunpack.c.l.b16 %v1510
    %v1585 = vunpack.c.h.b16 %v1510
    %v1586 = vunpack.c.l.b16 %v1511
    %v1587 = vunpack.c.h.b16 %v1511
    %v1588 = vunpack.c.l.b16 %v1512
    %v1589 = vunpack.c.h.b16 %v1512
    %v1590 = vunpack.c.l.b16 %v1513
    %v1591 = vunpack.c.h.b16 %v1513
    %v1592 = vunpack.c.l.b16 %v1514
    %v1593 = vunpack.c.h.b16 %v1514
    %v1594 = vunpack.c.l.b16 %v1515
    %v1595 = vunpack.c.h.b16 %v1515
    %v1596 = vunpack.c.l.b16 %v1516
    %v1597 = vunpack.c.h.b16 %v1516
    %v1598 = vunpack.c.l.b16 %v1517
    %v1599 = vunpack.c.h.b16 %v1517
    %v1600 = vunpack.c.l.b16 %v1518
    %v1601 = vunpack.c.h.b16 %v1518
    %v1602 = vunpack.c.l.b16 %v1519
    %v1603 = vunpack.c.h.b16 %v1519
    %v1604 = vunpack.c.l.b16 %v1520
    %v1605 = vunpack.c.h.b16 %v1520
    %v1606 = vunpack.c.l.b16 %v1521
    %v1607 = vunpack.c.h.b16 %v1521
    %v1608 = vunpack.c.l.b16 %v1522
    %v1609 = vunpack.c.h.b16 %v1522
    %v1610 = vunpack.c.l.b16 %v1523
    %v1611 = vunpack.c.h.b16 %v1523
    %v1612 = vunpack.c.l.b16 %v1524
    %v1613 = vunpack.c.h.b16 %v1524
    %v1614 = vunpack.c.l.b16 %v1525
    %v1615 = vunpack.c.h.b16 %v1525
    %v1616 = vunpack.c.l.b16 %v1526
    %v1617 = vunpack.c.h.b16 %v1526
    %v1618 = vunpack.c.l.b16 %v1527
    %v1619 = vunpack.c.h.b16 %v1527
    %v1620 = vunpack.c.l.b16 %v1528
    %v1621 = vunpack.c.h.b16 %v1528
    %v1622 = vunpack.c.l.b16 %v1529
    %v1623 = vunpack.c.h.b16 %v1529
    %v1624 = vunpack.c.l.b16 %v1530
    %v1625 = vunpack.c.h.b16 %v1530
    %v1626 = vunpack.c.l.b16 %v1531
    %v1627 = vunpack.c.h.b16 %v1531
    %v1628 = vpack.c.b16 %v1568, %v1564
    %v1629 = vpack.c.b16 %v1569, %v1565
    %v1630 = vpack.c.b16 %v1570, %v1566
    %v1631 = vpack.c.b16 %v1571, %v1567
    %v1632 = vpack.c.b16 %v1576, %v1572
    %v1633 = vpack.c.b16 %v1577, %v1573
    %v1634 = vpack.c.b16 %v1578, %v1574
    %v1635 = vpack.c.b16 %v1579, %v1575
    %v1636 = vpack.c.b16 %v1584, %v1580
    %v1637 = vpack.c.b16 %v1585, %v1581
    %v1638 = vpack.c.b16 %v1586, %v1582
    %v1639 = vpack.c.b16 %v1587, %v1583
    %v1640 = vpack.c.b16 %v1592, %v1588
    %v1641 = vpack.c.b16 %v1593, %v1589
    %v1642 = vpack.c.b16 %v1594, %v1590
    %v1643 = vpack.c.b16 %v1595, %v1591
    %v1644 = vpack.c.b16 %v1600, %v1596
    %v1645 = vpack.c.b16 %v1601, %v1597
    %v1646 = vpack.c.b16 %v1602, %v1598
    %v1647 = vpack.c.b16 %v1603, %v1599
    %v1648 = vpack.c.b16 %v1608, %v1604
    %v1649 = vpack.c.b16 %v1609, %v1605
    %v1650 = vpack.c.b16 %v1610, %v1606
    %v1651 = vpack.c.b16 %v1611, %v1607
    %v1652 = vpack.c.b16 %v1616, %v1612
    %v1653 = vpack.c.b16 %v1617, %v1613
    %v1654 = vpack.c.b16 %v1618, %v1614
    %v1655 = vpack.c.b16 %v1619, %v1615
    %v1656 = vpack.c.b16 %v1624, %v1620
    %v1657 = vpack.c.b16 %v1625, %v1621
    %v1658 = vpack.c.b16 %v1626, %v1622
    %v1659 = vpack.c.b16 %v1627, %v1623
    %1692 = vmatprep.subr.bf16.mxu0 %v1629
    %1693 = vmatpush1.bf16.msra.mxu0 %v1628
    %1694 = vmatprep.subr.bf16.mxu0 %v1633
    %1695 = vmatpush1.bf16.msra.mxu0 %v1632
    %1696 = vmatprep.subr.bf16.mxu0 %v1637
    %1697 = vmatpush1.bf16.msra.mxu0 %v1636
    %1698 = vmatprep.subr.bf16.mxu0 %v1641
    %1699 = vmatpush1.bf16.msra.mxu0 %v1640
    %1700 = vmatprep.subr.bf16.mxu0 %v1645
    %1701 = vmatpush1.bf16.msra.mxu0 %v1644
    %1702 = vmatprep.subr.bf16.mxu0 %v1649
    %1703 = vmatpush1.bf16.msra.mxu0 %v1648
    %1704 = vmatprep.subr.bf16.mxu0 %v1653
    %1705 = vmatpush1.bf16.msra.mxu0 %v1652
    %1706 = vmatprep.subr.bf16.mxu0 %v1657
    %1707 = vmatpush1.bf16.msra.mxu0 %v1656
    %1708 = vmatprep.subr.bf16.mxu0 0
    %1709 = vmatpush1.bf16.msra.mxu0 0
    %1710 = vmatprep.subr.bf16.mxu0 0
    %1711 = vmatpush1.bf16.msra.mxu0 0
    %1712 = vmatprep.subr.bf16.mxu0 0
    %1713 = vmatpush1.bf16.msra.mxu0 0
    %1714 = vmatprep.subr.bf16.mxu0 0
    %1715 = vmatpush1.bf16.msra.mxu0 0
    %1716 = vmatprep.subr.bf16.mxu0 0
    %1717 = vmatpush1.bf16.msra.mxu0 0
    %1718 = vmatprep.subr.bf16.mxu0 0
    %1719 = vmatpush1.bf16.msra.mxu0 0
    %1720 = vmatprep.subr.bf16.mxu0 0
    %1721 = vmatpush1.bf16.msra.mxu0 0
    %1722 = vmatprep.subr.bf16.mxu0 0
    %1723 = vmatpush1.bf16.msra.mxu0 0
    %1724 = vmatprep.mubr.bf16.mxu0 0
    %1725 = vmatmul.mubr.bf16.gmra.mrb[0].mxu0 0
    %v1726 = vpop.f32.mrb[0].mxu0
    %v1727 = vadd.f32 0.0, %v1726
    %v1728 = vpop.f32.mrb[0].mxu0
    %v1729 = vadd.f32 0.0, %v1728
    %v1730 = vpop.f32.mrb[0].mxu0
    %v1731 = vpop.f32.mrb[0].mxu0
    %1732 = vdwg.mxu0
    %1733 = vmatprep.subr.bf16.mxu0 %v1631
    %1734 = vmatpush1.bf16.msra.mxu0 %v1630
    %1735 = vmatprep.subr.bf16.mxu0 %v1635
    %1736 = vmatpush1.bf16.msra.mxu0 %v1634
    %1737 = vmatprep.subr.bf16.mxu0 %v1639
    %1738 = vmatpush1.bf16.msra.mxu0 %v1638
    %1739 = vmatprep.subr.bf16.mxu0 %v1643
    %1740 = vmatpush1.bf16.msra.mxu0 %v1642
    %1741 = vmatprep.subr.bf16.mxu0 %v1647
    %1742 = vmatpush1.bf16.msra.mxu0 %v1646
    %1743 = vmatprep.subr.bf16.mxu0 %v1651
    %1744 = vmatpush1.bf16.msra.mxu0 %v1650
    %1745 = vmatprep.subr.bf16.mxu0 %v1655
    %1746 = vmatpush1.bf16.msra.mxu0 %v1654
    %1747 = vmatprep.subr.bf16.mxu0 %v1659
    %1748 = vmatpush1.bf16.msra.mxu0 %v1658
    %1749 = vmatprep.subr.bf16.mxu0 0
    %1750 = vmatpush1.bf16.msra.mxu0 0
    %1751 = vmatprep.subr.bf16.mxu0 0
    %1752 = vmatpush1.bf16.msra.mxu0 0
    %1753 = vmatprep.subr.bf16.mxu0 0
    %1754 = vmatpush1.bf16.msra.mxu0 0
    %1755 = vmatprep.subr.bf16.mxu0 0
    %1756 = vmatpush1.bf16.msra.mxu0 0
    %1757 = vmatprep.subr.bf16.mxu0 0
    %1758 = vmatpush1.bf16.msra.mxu0 0
    %1759 = vmatprep.subr.bf16.mxu0 0
    %1760 = vmatpush1.bf16.msra.mxu0 0
    %1761 = vmatprep.subr.bf16.mxu0 0
    %1762 = vmatpush1.bf16.msra.mxu0 0
    %1763 = vmatprep.subr.bf16.mxu0 0
    %1764 = vmatpush1.bf16.msra.mxu0 0
    %1765 = vmatprep.mubr.bf16.mxu0 0
    %1766 = vmatmul.mubr.bf16.gmra.mrb[0].mxu0 0
    %v1767 = vpop.f32.mrb[0].mxu0
    %v1768 = vadd.f32 0.0, %v1767
    %v1769 = vpop.f32.mrb[0].mxu0
    %v1770 = vadd.f32 0.0, %v1769
    %v1771 = vpop.f32.mrb[0].mxu0
    %v1772 = vpop.f32.mrb[0].mxu0
    %1773 = vdwg.mxu0
    %v1774 = vadd.f32 %v1194, %v1727
    %v1775 = vadd.f32 %v1195, %v1729
    %v1776 = vadd.f32 %v1196, %v1768
    %v1777 = vadd.f32 %v1197, %v1770
    %v1778 = vxor.u32 %v1774, 2147483648
    %v1779 = vmul.f32 %v1778, 1.442695
    %v1780 = vpow.pop %v1779
    %v1781 = vadd.f32 %v1780, 1.0
    %v1782 = vrcp.pop %v1781
    %v1783 = vmul.f32 1.0, %v1782
    %v1784 = vxor.u32 %v1775, 2147483648
    %v1785 = vmul.f32 %v1784, 1.442695
    %v1786 = vpow.pop %v1785
    %v1787 = vadd.f32 %v1786, 1.0
    %v1788 = vrcp.pop %v1787
    %v1789 = vmul.f32 1.0, %v1788
    %v1790 = vtanh.pop %v1776
    %v1791 = vxor.u32 %v1777, 2147483648
    %v1792 = vmul.f32 %v1791, 1.442695
    %v1793 = vpow.pop %v1792
    %v1794 = vadd.f32 %v1793, 1.0
    %v1795 = vrcp.pop %v1794
    %v1796 = vmul.f32 1.0, %v1795
    %v1797 = vmul.f32 %v1789, 0.0
    %v1798 = vmul.f32 %v1783, %v1790
    %v1799 = vadd.f32 %v1797, %v1798
    %v1800 = vtanh.pop %v1799
    %v1801 = vmul.f32 %v1796, %v1800
    %v1803 = vcombine.high %v1499, %v1499
    %v1805 = vunpack.c.l.s4 1983009808
    %v1806 = vunpack.c.0.s8 %v1805
    %v1807 = vlaneseq
    %v1808 = vshrl.u32 %v1807, 7
    %v1809 = vsub.s32 %v1806, %v1808
    %v1810 = vrot.slane %v1803, %v1809
    %v1811 = vcombine.high %v1810, %v1810
    %v1812 = vrot.slane %v1811, 7
    %v1813 = vrot.slane %v1812, 2
    %1815 = vst [vmem:[#allocation2] sm:$0x1] %v1813
    %v1817 = vcombine.high %v1801, %v1801
    %v1819 = vunpack.c.l.s4 1983009808
    %v1820 = vunpack.c.0.s8 %v1819
    %v1821 = vlaneseq
    %v1822 = vshrl.u32 %v1821, 7
    %v1823 = vsub.s32 %v1820, %v1822
    %v1824 = vrot.slane %v1817, %v1823
    %v1825 = vcombine.high %v1824, %v1824
    %v1826 = vrot.slane %v1825, 7
    %v1827 = vrot.slane %v1826, 2
    %1829 = vst [vmem:[#allocation2 + $0x3] sm:$0x1] %v1827
    %v1830 = vpack.c.bf16 %v1499, %v1499
    %v1831 = vld [vmem:[#allocation6] sm:$0xff]
    %v1832 = vld [vmem:[#allocation6 + $0x8] sm:$0xff]
    %v1833 = vld [vmem:[#allocation6 + $0x10] sm:$0xff]
    %v1834 = vld [vmem:[#allocation6 + $0x18] sm:$0xff]
    %v1835 = vld [vmem:[#allocation6 + $0x20] sm:$0xff]
    %v1836 = vld [vmem:[#allocation6 + $0x28] sm:$0xff]
    %v1837 = vld [vmem:[#allocation6 + $0x30] sm:$0xff]
    %v1838 = vld [vmem:[#allocation6 + $0x38] sm:$0xff]
    %v1839 = vld [vmem:[#allocation6 + $0x40] sm:$0xff]
    %v1840 = vld [vmem:[#allocation6 + $0x48] sm:$0xff]
    %v1841 = vld [vmem:[#allocation6 + $0x50] sm:$0xff]
    %v1842 = vld [vmem:[#allocation6 + $0x58] sm:$0xff]
    %v1843 = vld [vmem:[#allocation6 + $0x60] sm:$0xff]
    %v1844 = vld [vmem:[#allocation6 + $0x68] sm:$0xff]
    %v1845 = vld [vmem:[#allocation6 + $0x70] sm:$0xff]
    %v1846 = vld [vmem:[#allocation6 + $0x78] sm:$0xff]
    %v1847 = vld [vmem:[#allocation6 + $0x80] sm:$0xff]
    %v1848 = vld [vmem:[#allocation6 + $0x88] sm:$0xff]
    %v1849 = vld [vmem:[#allocation6 + $0x90] sm:$0xff]
    %v1850 = vld [vmem:[#allocation6 + $0x98] sm:$0xff]
    %v1851 = vld [vmem:[#allocation6 + $0xa0] sm:$0xff]
    %v1852 = vld [vmem:[#allocation6 + $0xa8] sm:$0xff]
    %v1853 = vld [vmem:[#allocation6 + $0xb0] sm:$0xff]
    %v1854 = vld [vmem:[#allocation6 + $0xb8] sm:$0xff]
    %v1855 = vld [vmem:[#allocation6 + $0xc0] sm:$0xff]
    %v1856 = vld [vmem:[#allocation6 + $0xc8] sm:$0xff]
    %v1857 = vld [vmem:[#allocation6 + $0xd0] sm:$0xff]
    %v1858 = vld [vmem:[#allocation6 + $0xd8] sm:$0xff]
    %v1859 = vld [vmem:[#allocation6 + $0xe0] sm:$0xff]
    %v1860 = vld [vmem:[#allocation6 + $0xe8] sm:$0xff]
    %v1861 = vld [vmem:[#allocation6 + $0xf0] sm:$0xff]
    %v1862 = vld [vmem:[#allocation6 + $0xf8] sm:$0xff]
    %v1895 = vunpack.c.l.b16 %v1831
    %v1896 = vunpack.c.h.b16 %v1831
    %v1897 = vunpack.c.l.b16 %v1832
    %v1898 = vunpack.c.h.b16 %v1832
    %v1899 = vunpack.c.l.b16 %v1833
    %v1900 = vunpack.c.h.b16 %v1833
    %v1901 = vunpack.c.l.b16 %v1834
    %v1902 = vunpack.c.h.b16 %v1834
    %v1903 = vunpack.c.l.b16 %v1835
    %v1904 = vunpack.c.h.b16 %v1835
    %v1905 = vunpack.c.l.b16 %v1836
    %v1906 = vunpack.c.h.b16 %v1836
    %v1907 = vunpack.c.l.b16 %v1837
    %v1908 = vunpack.c.h.b16 %v1837
    %v1909 = vunpack.c.l.b16 %v1838
    %v1910 = vunpack.c.h.b16 %v1838
    %v1911 = vunpack.c.l.b16 %v1839
    %v1912 = vunpack.c.h.b16 %v1839
    %v1913 = vunpack.c.l.b16 %v1840
    %v1914 = vunpack.c.h.b16 %v1840
    %v1915 = vunpack.c.l.b16 %v1841
    %v1916 = vunpack.c.h.b16 %v1841
    %v1917 = vunpack.c.l.b16 %v1842
    %v1918 = vunpack.c.h.b16 %v1842
    %v1919 = vunpack.c.l.b16 %v1843
    %v1920 = vunpack.c.h.b16 %v1843
    %v1921 = vunpack.c.l.b16 %v1844
    %v1922 = vunpack.c.h.b16 %v1844
    %v1923 = vunpack.c.l.b16 %v1845
    %v1924 = vunpack.c.h.b16 %v1845
    %v1925 = vunpack.c.l.b16 %v1846
    %v1926 = vunpack.c.h.b16 %v1846
    %v1927 = vunpack.c.l.b16 %v1847
    %v1928 = vunpack.c.h.b16 %v1847
    %v1929 = vunpack.c.l.b16 %v1848
    %v1930 = vunpack.c.h.b16 %v1848
    %v1931 = vunpack.c.l.b16 %v1849
    %v1932 = vunpack.c.h.b16 %v1849
    %v1933 = vunpack.c.l.b16 %v1850
    %v1934 = vunpack.c.h.b16 %v1850
    %v1935 = vunpack.c.l.b16 %v1851
    %v1936 = vunpack.c.h.b16 %v1851
    %v1937 = vunpack.c.l.b16 %v1852
    %v1938 = vunpack.c.h.b16 %v1852
    %v1939 = vunpack.c.l.b16 %v1853
    %v1940 = vunpack.c.h.b16 %v1853
    %v1941 = vunpack.c.l.b16 %v1854
    %v1942 = vunpack.c.h.b16 %v1854
    %v1943 = vunpack.c.l.b16 %v1855
    %v1944 = vunpack.c.h.b16 %v1855
    %v1945 = vunpack.c.l.b16 %v1856
    %v1946 = vunpack.c.h.b16 %v1856
    %v1947 = vunpack.c.l.b16 %v1857
    %v1948 = vunpack.c.h.b16 %v1857
    %v1949 = vunpack.c.l.b16 %v1858
    %v1950 = vunpack.c.h.b16 %v1858
    %v1951 = vunpack.c.l.b16 %v1859
    %v1952 = vunpack.c.h.b16 %v1859
    %v1953 = vunpack.c.l.b16 %v1860
    %v1954 = vunpack.c.h.b16 %v1860
    %v1955 = vunpack.c.l.b16 %v1861
    %v1956 = vunpack.c.h.b16 %v1861
    %v1957 = vunpack.c.l.b16 %v1862
    %v1958 = vunpack.c.h.b16 %v1862
    %v1959 = vpack.c.b16 %v1899, %v1895
    %v1960 = vpack.c.b16 %v1900, %v1896
    %v1961 = vpack.c.b16 %v1901, %v1897
    %v1962 = vpack.c.b16 %v1902, %v1898
    %v1963 = vpack.c.b16 %v1907, %v1903
    %v1964 = vpack.c.b16 %v1908, %v1904
    %v1965 = vpack.c.b16 %v1909, %v1905
    %v1966 = vpack.c.b16 %v1910, %v1906
    %v1967 = vpack.c.b16 %v1915, %v1911
    %v1968 = vpack.c.b16 %v1916, %v1912
    %v1969 = vpack.c.b16 %v1917, %v1913
    %v1970 = vpack.c.b16 %v1918, %v1914
    %v1971 = vpack.c.b16 %v1923, %v1919
    %v1972 = vpack.c.b16 %v1924, %v1920
    %v1973 = vpack.c.b16 %v1925, %v1921
    %v1974 = vpack.c.b16 %v1926, %v1922
    %v1975 = vpack.c.b16 %v1931, %v1927
    %v1976 = vpack.c.b16 %v1932, %v1928
    %v1977 = vpack.c.b16 %v1933, %v1929
    %v1978 = vpack.c.b16 %v1934, %v1930
    %v1979 = vpack.c.b16 %v1939, %v1935
    %v1980 = vpack.c.b16 %v1940, %v1936
    %v1981 = vpack.c.b16 %v1941, %v1937
    %v1982 = vpack.c.b16 %v1942, %v1938
    %v1983 = vpack.c.b16 %v1947, %v1943
    %v1984 = vpack.c.b16 %v1948, %v1944
    %v1985 = vpack.c.b16 %v1949, %v1945
    %v1986 = vpack.c.b16 %v1950, %v1946
    %v1987 = vpack.c.b16 %v1955, %v1951
    %v1988 = vpack.c.b16 %v1956, %v1952
    %v1989 = vpack.c.b16 %v1957, %v1953
    %v1990 = vpack.c.b16 %v1958, %v1954
    %2023 = vmatprep.subr.bf16.mxu0 %v1960
    %2024 = vmatpush1.bf16.msra.mxu0 %v1959
    %2025 = vmatprep.subr.bf16.mxu0 %v1964
    %2026 = vmatpush1.bf16.msra.mxu0 %v1963
    %2027 = vmatprep.subr.bf16.mxu0 %v1968
    %2028 = vmatpush1.bf16.msra.mxu0 %v1967
    %2029 = vmatprep.subr.bf16.mxu0 %v1972
    %2030 = vmatpush1.bf16.msra.mxu0 %v1971
    %2031 = vmatprep.subr.bf16.mxu0 %v1976
    %2032 = vmatpush1.bf16.msra.mxu0 %v1975
    %2033 = vmatprep.subr.bf16.mxu0 %v1980
    %2034 = vmatpush1.bf16.msra.mxu0 %v1979
    %2035 = vmatprep.subr.bf16.mxu0 %v1984
    %2036 = vmatpush1.bf16.msra.mxu0 %v1983
    %2037 = vmatprep.subr.bf16.mxu0 %v1988
    %2038 = vmatpush1.bf16.msra.mxu0 %v1987
    %2039 = vmatprep.subr.bf16.mxu0 0
    %2040 = vmatpush1.bf16.msra.mxu0 0
    %2041 = vmatprep.subr.bf16.mxu0 0
    %2042 = vmatpush1.bf16.msra.mxu0 0
    %2043 = vmatprep.subr.bf16.mxu0 0
    %2044 = vmatpush1.bf16.msra.mxu0 0
    %2045 = vmatprep.subr.bf16.mxu0 0
    %2046 = vmatpush1.bf16.msra.mxu0 0
    %2047 = vmatprep.subr.bf16.mxu0 0
    %2048 = vmatpush1.bf16.msra.mxu0 0
    %2049 = vmatprep.subr.bf16.mxu0 0
    %2050 = vmatpush1.bf16.msra.mxu0 0
    %2051 = vmatprep.subr.bf16.mxu0 0
    %2052 = vmatpush1.bf16.msra.mxu0 0
    %2053 = vmatprep.subr.bf16.mxu0 0
    %2054 = vmatpush1.bf16.msra.mxu0 0
    %2055 = vmatprep.mubr.bf16.mxu0 0
    %2056 = vmatmul.mubr.bf16.gmra.mrb[0].mxu0 %v1830
    %v2057 = vpop.f32.mrb[0].mxu0
    %v2058 = vadd.f32 0.0, %v2057
    %v2059 = vpop.f32.mrb[0].mxu0
    %v2060 = vadd.f32 0.0, %v2059
    %v2061 = vpop.f32.mrb[0].mxu0
    %v2062 = vpop.f32.mrb[0].mxu0
    %2063 = vdwg.mxu0
    %2064 = vmatprep.subr.bf16.mxu0 %v1962
    %2065 = vmatpush1.bf16.msra.mxu0 %v1961
    %2066 = vmatprep.subr.bf16.mxu0 %v1966
    %2067 = vmatpush1.bf16.msra.mxu0 %v1965
    %2068 = vmatprep.subr.bf16.mxu0 %v1970
    %2069 = vmatpush1.bf16.msra.mxu0 %v1969
    %2070 = vmatprep.subr.bf16.mxu0 %v1974
    %2071 = vmatpush1.bf16.msra.mxu0 %v1973
    %2072 = vmatprep.subr.bf16.mxu0 %v1978
    %2073 = vmatpush1.bf16.msra.mxu0 %v1977
    %2074 = vmatprep.subr.bf16.mxu0 %v1982
    %2075 = vmatpush1.bf16.msra.mxu0 %v1981
    %2076 = vmatprep.subr.bf16.mxu0 %v1986
    %2077 = vmatpush1.bf16.msra.mxu0 %v1985
    %2078 = vmatprep.subr.bf16.mxu0 %v1990
    %2079 = vmatpush1.bf16.msra.mxu0 %v1989
    %2080 = vmatprep.subr.bf16.mxu0 0
    %2081 = vmatpush1.bf16.msra.mxu0 0
    %2082 = vmatprep.subr.bf16.mxu0 0
    %2083 = vmatpush1.bf16.msra.mxu0 0
    %2084 = vmatprep.subr.bf16.mxu0 0
    %2085 = vmatpush1.bf16.msra.mxu0 0
    %2086 = vmatprep.subr.bf16.mxu0 0
    %2087 = vmatpush1.bf16.msra.mxu0 0
    %2088 = vmatprep.subr.bf16.mxu0 0
    %2089 = vmatpush1.bf16.msra.mxu0 0
    %2090 = vmatprep.subr.bf16.mxu0 0
    %2091 = vmatpush1.bf16.msra.mxu0 0
    %2092 = vmatprep.subr.bf16.mxu0 0
    %2093 = vmatpush1.bf16.msra.mxu0 0
    %2094 = vmatprep.subr.bf16.mxu0 0
    %2095 = vmatpush1.bf16.msra.mxu0 0
    %2096 = vmatprep.mubr.bf16.mxu0 0
    %2097 = vmatmul.mubr.bf16.gmra.mrb[0].mxu0 %v1830
    %v2098 = vpop.f32.mrb[0].mxu0
    %v2099 = vadd.f32 0.0, %v2098
    %v2100 = vpop.f32.mrb[0].mxu0
    %v2101 = vadd.f32 0.0, %v2100
    %v2102 = vpop.f32.mrb[0].mxu0
    %v2103 = vpop.f32.mrb[0].mxu0
    %2104 = vdwg.mxu0
    %v2105 = vadd.f32 %v1190, %v2058
    %v2106 = vadd.f32 %v1191, %v2060
    %v2107 = vadd.f32 %v1192, %v2099
    %v2108 = vadd.f32 %v1193, %v2101
    %v2109 = vxor.u32 %v2105, 2147483648
    %v2110 = vmul.f32 %v2109, 1.442695
    %v2111 = vpow.pop %v2110
    %v2112 = vadd.f32 %v2111, 1.0
    %v2113 = vrcp.pop %v2112
    %v2114 = vmul.f32 1.0, %v2113
    %v2115 = vxor.u32 %v2106, 2147483648
    %v2116 = vmul.f32 %v2115, 1.442695
    %v2117 = vpow.pop %v2116
    %v2118 = vadd.f32 %v2117, 1.0
    %v2119 = vrcp.pop %v2118
    %v2120 = vmul.f32 1.0, %v2119
    %v2121 = vtanh.pop %v2107
    %v2122 = vxor.u32 %v2108, 2147483648
    %v2123 = vmul.f32 %v2122, 1.442695
    %v2124 = vpow.pop %v2123
    %v2125 = vadd.f32 %v2124, 1.0
    %v2126 = vrcp.pop %v2125
    %v2127 = vmul.f32 1.0, %v2126
    %v2128 = vmul.f32 %v2120, %v1497
    %v2129 = vmul.f32 %v2114, %v2121
    %v2130 = vadd.f32 %v2128, %v2129
    %v2131 = vtanh.pop %v2130
    %v2132 = vmul.f32 %v2127, %v2131
    %v2133 = vpack.c.bf16 %v1801, %v1801
    %v2134 = vld [vmem:[#allocation8] sm:$0xff]
    %v2135 = vld [vmem:[#allocation8 + $0x8] sm:$0xff]
    %v2136 = vld [vmem:[#allocation8 + $0x10] sm:$0xff]
    %v2137 = vld [vmem:[#allocation8 + $0x18] sm:$0xff]
    %v2138 = vld [vmem:[#allocation8 + $0x20] sm:$0xff]
    %v2139 = vld [vmem:[#allocation8 + $0x28] sm:$0xff]
    %v2140 = vld [vmem:[#allocation8 + $0x30] sm:$0xff]
    %v2141 = vld [vmem:[#allocation8 + $0x38] sm:$0xff]
    %v2142 = vld [vmem:[#allocation8 + $0x40] sm:$0xff]
    %v2143 = vld [vmem:[#allocation8 + $0x48] sm:$0xff]
    %v2144 = vld [vmem:[#allocation8 + $0x50] sm:$0xff]
    %v2145 = vld [vmem:[#allocation8 + $0x58] sm:$0xff]
    %v2146 = vld [vmem:[#allocation8 + $0x60] sm:$0xff]
    %v2147 = vld [vmem:[#allocation8 + $0x68] sm:$0xff]
    %v2148 = vld [vmem:[#allocation8 + $0x70] sm:$0xff]
    %v2149 = vld [vmem:[#allocation8 + $0x78] sm:$0xff]
    %v2150 = vld [vmem:[#allocation8 + $0x80] sm:$0xff]
    %v2151 = vld [vmem:[#allocation8 + $0x88] sm:$0xff]
    %v2152 = vld [vmem:[#allocation8 + $0x90] sm:$0xff]
    %v2153 = vld [vmem:[#allocation8 + $0x98] sm:$0xff]
    %v2154 = vld [vmem:[#allocation8 + $0xa0] sm:$0xff]
    %v2155 = vld [vmem:[#allocation8 + $0xa8] sm:$0xff]
    %v2156 = vld [vmem:[#allocation8 + $0xb0] sm:$0xff]
    %v2157 = vld [vmem:[#allocation8 + $0xb8] sm:$0xff]
    %v2158 = vld [vmem:[#allocation8 + $0xc0] sm:$0xff]
    %v2159 = vld [vmem:[#allocation8 + $0xc8] sm:$0xff]
    %v2160 = vld [vmem:[#allocation8 + $0xd0] sm:$0xff]
    %v2161 = vld [vmem:[#allocation8 + $0xd8] sm:$0xff]
    %v2162 = vld [vmem:[#allocation8 + $0xe0] sm:$0xff]
    %v2163 = vld [vmem:[#allocation8 + $0xe8] sm:$0xff]
    %v2164 = vld [vmem:[#allocation8 + $0xf0] sm:$0xff]
    %v2165 = vld [vmem:[#allocation8 + $0xf8] sm:$0xff]
    %v2198 = vunpack.c.l.b16 %v2134
    %v2199 = vunpack.c.h.b16 %v2134
    %v2200 = vunpack.c.l.b16 %v2135
    %v2201 = vunpack.c.h.b16 %v2135
    %v2202 = vunpack.c.l.b16 %v2136
    %v2203 = vunpack.c.h.b16 %v2136
    %v2204 = vunpack.c.l.b16 %v2137
    %v2205 = vunpack.c.h.b16 %v2137
    %v2206 = vunpack.c.l.b16 %v2138
    %v2207 = vunpack.c.h.b16 %v2138
    %v2208 = vunpack.c.l.b16 %v2139
    %v2209 = vunpack.c.h.b16 %v2139
    %v2210 = vunpack.c.l.b16 %v2140
    %v2211 = vunpack.c.h.b16 %v2140
    %v2212 = vunpack.c.l.b16 %v2141
    %v2213 = vunpack.c.h.b16 %v2141
    %v2214 = vunpack.c.l.b16 %v2142
    %v2215 = vunpack.c.h.b16 %v2142
    %v2216 = vunpack.c.l.b16 %v2143
    %v2217 = vunpack.c.h.b16 %v2143
    %v2218 = vunpack.c.l.b16 %v2144
    %v2219 = vunpack.c.h.b16 %v2144
    %v2220 = vunpack.c.l.b16 %v2145
    %v2221 = vunpack.c.h.b16 %v2145
    %v2222 = vunpack.c.l.b16 %v2146
    %v2223 = vunpack.c.h.b16 %v2146
    %v2224 = vunpack.c.l.b16 %v2147
    %v2225 = vunpack.c.h.b16 %v2147
    %v2226 = vunpack.c.l.b16 %v2148
    %v2227 = vunpack.c.h.b16 %v2148
    %v2228 = vunpack.c.l.b16 %v2149
    %v2229 = vunpack.c.h.b16 %v2149
    %v2230 = vunpack.c.l.b16 %v2150
    %v2231 = vunpack.c.h.b16 %v2150
    %v2232 = vunpack.c.l.b16 %v2151
    %v2233 = vunpack.c.h.b16 %v2151
    %v2234 = vunpack.c.l.b16 %v2152
    %v2235 = vunpack.c.h.b16 %v2152
    %v2236 = vunpack.c.l.b16 %v2153
    %v2237 = vunpack.c.h.b16 %v2153
    %v2238 = vunpack.c.l.b16 %v2154
    %v2239 = vunpack.c.h.b16 %v2154
    %v2240 = vunpack.c.l.b16 %v2155
    %v2241 = vunpack.c.h.b16 %v2155
    %v2242 = vunpack.c.l.b16 %v2156
    %v2243 = vunpack.c.h.b16 %v2156
    %v2244 = vunpack.c.l.b16 %v2157
    %v2245 = vunpack.c.h.b16 %v2157
    %v2246 = vunpack.c.l.b16 %v2158
    %v2247 = vunpack.c.h.b16 %v2158
    %v2248 = vunpack.c.l.b16 %v2159
    %v2249 = vunpack.c.h.b16 %v2159
    %v2250 = vunpack.c.l.b16 %v2160
    %v2251 = vunpack.c.h.b16 %v2160
    %v2252 = vunpack.c.l.b16 %v2161
    %v2253 = vunpack.c.h.b16 %v2161
    %v2254 = vunpack.c.l.b16 %v2162
    %v2255 = vunpack.c.h.b16 %v2162
    %v2256 = vunpack.c.l.b16 %v2163
    %v2257 = vunpack.c.h.b16 %v2163
    %v2258 = vunpack.c.l.b16 %v2164
    %v2259 = vunpack.c.h.b16 %v2164
    %v2260 = vunpack.c.l.b16 %v2165
    %v2261 = vunpack.c.h.b16 %v2165
    %v2262 = vpack.c.b16 %v2202, %v2198
    %v2263 = vpack.c.b16 %v2203, %v2199
    %v2264 = vpack.c.b16 %v2204, %v2200
    %v2265 = vpack.c.b16 %v2205, %v2201
    %v2266 = vpack.c.b16 %v2210, %v2206
    %v2267 = vpack.c.b16 %v2211, %v2207
    %v2268 = vpack.c.b16 %v2212, %v2208
    %v2269 = vpack.c.b16 %v2213, %v2209
    %v2270 = vpack.c.b16 %v2218, %v2214
    %v2271 = vpack.c.b16 %v2219, %v2215
    %v2272 = vpack.c.b16 %v2220, %v2216
    %v2273 = vpack.c.b16 %v2221, %v2217
    %v2274 = vpack.c.b16 %v2226, %v2222
    %v2275 = vpack.c.b16 %v2227, %v2223
    %v2276 = vpack.c.b16 %v2228, %v2224
    %v2277 = vpack.c.b16 %v2229, %v2225
    %v2278 = vpack.c.b16 %v2234, %v2230
    %v2279 = vpack.c.b16 %v2235, %v2231
    %v2280 = vpack.c.b16 %v2236, %v2232
    %v2281 = vpack.c.b16 %v2237, %v2233
    %v2282 = vpack.c.b16 %v2242, %v2238
    %v2283 = vpack.c.b16 %v2243, %v2239
    %v2284 = vpack.c.b16 %v2244, %v2240
    %v2285 = vpack.c.b16 %v2245, %v2241
    %v2286 = vpack.c.b16 %v2250, %v2246
    %v2287 = vpack.c.b16 %v2251, %v2247
    %v2288 = vpack.c.b16 %v2252, %v2248
    %v2289 = vpack.c.b16 %v2253, %v2249
    %v2290 = vpack.c.b16 %v2258, %v2254
    %v2291 = vpack.c.b16 %v2259, %v2255
    %v2292 = vpack.c.b16 %v2260, %v2256
    %v2293 = vpack.c.b16 %v2261, %v2257
    %2326 = vmatprep.subr.bf16.mxu0 %v2263
    %2327 = vmatpush1.bf16.msra.mxu0 %v2262
    %2328 = vmatprep.subr.bf16.mxu0 %v2267
    %2329 = vmatpush1.bf16.msra.mxu0 %v2266
    %2330 = vmatprep.subr.bf16.mxu0 %v2271
    %2331 = vmatpush1.bf16.msra.mxu0 %v2270
    %2332 = vmatprep.subr.bf16.mxu0 %v2275
    %2333 = vmatpush1.bf16.msra.mxu0 %v2274
    %2334 = vmatprep.subr.bf16.mxu0 %v2279
    %2335 = vmatpush1.bf16.msra.mxu0 %v2278
    %2336 = vmatprep.subr.bf16.mxu0 %v2283
    %2337 = vmatpush1.bf16.msra.mxu0 %v2282
    %2338 = vmatprep.subr.bf16.mxu0 %v2287
    %2339 = vmatpush1.bf16.msra.mxu0 %v2286
    %2340 = vmatprep.subr.bf16.mxu0 %v2291
    %2341 = vmatpush1.bf16.msra.mxu0 %v2290
    %2342 = vmatprep.subr.bf16.mxu0 0
    %2343 = vmatpush1.bf16.msra.mxu0 0
    %2344 = vmatprep.subr.bf16.mxu0 0
    %2345 = vmatpush1.bf16.msra.mxu0 0
    %2346 = vmatprep.subr.bf16.mxu0 0
    %2347 = vmatpush1.bf16.msra.mxu0 0
    %2348 = vmatprep.subr.bf16.mxu0 0
    %2349 = vmatpush1.bf16.msra.mxu0 0
    %2350 = vmatprep.subr.bf16.mxu0 0
    %2351 = vmatpush1.bf16.msra.mxu0 0
    %2352 = vmatprep.subr.bf16.mxu0 0
    %2353 = vmatpush1.bf16.msra.mxu0 0
    %2354 = vmatprep.subr.bf16.mxu0 0
    %2355 = vmatpush1.bf16.msra.mxu0 0
    %2356 = vmatprep.subr.bf16.mxu0 0
    %2357 = vmatpush1.bf16.msra.mxu0 0
    %2358 = vmatprep.mubr.bf16.mxu0 0
    %2359 = vmatmul.mubr.bf16.gmra.mrb[0].mxu0 %v2133
    %v2360 = vpop.f32.mrb[0].mxu0
    %v2361 = vadd.f32 0.0, %v2360
    %v2362 = vpop.f32.mrb[0].mxu0
    %v2363 = vadd.f32 0.0, %v2362
    %v2364 = vpop.f32.mrb[0].mxu0
    %v2365 = vpop.f32.mrb[0].mxu0
    %2366 = vdwg.mxu0
    %2367 = vmatprep.subr.bf16.mxu0 %v2265
    %2368 = vmatpush1.bf16.msra.mxu0 %v2264
    %2369 = vmatprep.subr.bf16.mxu0 %v2269
    %2370 = vmatpush1.bf16.msra.mxu0 %v2268
    %2371 = vmatprep.subr.bf16.mxu0 %v2273
    %2372 = vmatpush1.bf16.msra.mxu0 %v2272
    %2373 = vmatprep.subr.bf16.mxu0 %v2277
    %2374 = vmatpush1.bf16.msra.mxu0 %v2276
    %2375 = vmatprep.subr.bf16.mxu0 %v2281
    %2376 = vmatpush1.bf16.msra.mxu0 %v2280
    %2377 = vmatprep.subr.bf16.mxu0 %v2285
    %2378 = vmatpush1.bf16.msra.mxu0 %v2284
    %2379 = vmatprep.subr.bf16.mxu0 %v2289
    %2380 = vmatpush1.bf16.msra.mxu0 %v2288
    %2381 = vmatprep.subr.bf16.mxu0 %v2293
    %2382 = vmatpush1.bf16.msra.mxu0 %v2292
    %2383 = vmatprep.subr.bf16.mxu0 0
    %2384 = vmatpush1.bf16.msra.mxu0 0
    %2385 = vmatprep.subr.bf16.mxu0 0
    %2386 = vmatpush1.bf16.msra.mxu0 0
    %2387 = vmatprep.subr.bf16.mxu0 0
    %2388 = vmatpush1.bf16.msra.mxu0 0
    %2389 = vmatprep.subr.bf16.mxu0 0
    %2390 = vmatpush1.bf16.msra.mxu0 0
    %2391 = vmatprep.subr.bf16.mxu0 0
    %2392 = vmatpush1.bf16.msra.mxu0 0
    %2393 = vmatprep.subr.bf16.mxu0 0
    %2394 = vmatpush1.bf16.msra.mxu0 0
    %2395 = vmatprep.subr.bf16.mxu0 0
    %2396 = vmatpush1.bf16.msra.mxu0 0
    %2397 = vmatprep.subr.bf16.mxu0 0
    %2398 = vmatpush1.bf16.msra.mxu0 0
    %2399 = vmatprep.mubr.bf16.mxu0 0
    %2400 = vmatmul.mubr.bf16.gmra.mrb[0].mxu0 %v2133
    %v2401 = vpop.f32.mrb[0].mxu0
    %v2402 = vadd.f32 0.0, %v2401
    %v2403 = vpop.f32.mrb[0].mxu0
    %v2404 = vadd.f32 0.0, %v2403
    %v2405 = vpop.f32.mrb[0].mxu0
    %v2406 = vpop.f32.mrb[0].mxu0
    %2407 = vdwg.mxu0
    %v2408 = vadd.f32 %v1186, %v2361
    %v2409 = vadd.f32 %v1187, %v2363
    %v2410 = vadd.f32 %v1188, %v2402
    %v2411 = vadd.f32 %v1189, %v2404
    %v2412 = vxor.u32 %v2408, 2147483648
    %v2413 = vmul.f32 %v2412, 1.442695
    %v2414 = vpow.pop %v2413
    %v2415 = vadd.f32 %v2414, 1.0
    %v2416 = vrcp.pop %v2415
    %v2417 = vmul.f32 1.0, %v2416
    %v2418 = vxor.u32 %v2409, 2147483648
    %v2419 = vmul.f32 %v2418, 1.442695
    %v2420 = vpow.pop %v2419
    %v2421 = vadd.f32 %v2420, 1.0
    %v2422 = vrcp.pop %v2421
    %v2423 = vmul.f32 1.0, %v2422
    %v2424 = vtanh.pop %v2410
    %v2425 = vxor.u32 %v2411, 2147483648
    %v2426 = vmul.f32 %v2425, 1.442695
    %v2427 = vpow.pop %v2426
    %v2428 = vadd.f32 %v2427, 1.0
    %v2429 = vrcp.pop %v2428
    %v2430 = vmul.f32 1.0, %v2429
    %v2431 = vmul.f32 %v2423, %v1799
    %v2432 = vmul.f32 %v2417, %v2424
    %v2433 = vadd.f32 %v2431, %v2432
    %v2434 = vtanh.pop %v2433
    %v2435 = vmul.f32 %v2430, %v2434
    %v2437 = vcombine.high %v2132, %v2132
    %v2439 = vunpack.c.l.s4 1983009808
    %v2440 = vunpack.c.0.s8 %v2439
    %v2441 = vlaneseq
    %v2442 = vshrl.u32 %v2441, 7
    %v2443 = vsub.s32 %v2440, %v2442
    %v2444 = vrot.slane %v2437, %v2443
    %v2445 = vcombine.high %v2444, %v2444
    %v2446 = vrot.slane %v2445, 7
    %v2447 = vrot.slane %v2446, 2
    %2449 = vst [vmem:[#allocation2 + $0x1] sm:$0x1] %v2447
    %v2451 = vcombine.high %v2435, %v2435
    %v2453 = vunpack.c.l.s4 1983009808
    %v2454 = vunpack.c.0.s8 %v2453
    %v2455 = vlaneseq
    %v2456 = vshrl.u32 %v2455, 7
    %v2457 = vsub.s32 %v2454, %v2456
    %v2458 = vrot.slane %v2451, %v2457
    %v2459 = vcombine.high %v2458, %v2458
    %v2460 = vrot.slane %v2459, 7
    %v2461 = vrot.slane %v2460, 2
    %2463 = vst [vmem:[#allocation2 + $0x2] sm:$0x1] %v2461
    %v2464 = vld [vmem:[#allocation2] sm:$0xf]
    %v2465 = vld [vmem:[%s5] sm:$0x3]
    %v2467 = vlaneseq
    %v2468 = vshrl.u32 %v2467, 7
    %v2469 = vsub.s32 0, %v2468
    %v2470 = vrot.slane %v2465, %v2469
    %v2471 = vlaneseq
    %v2472 = vshrl.u32 %v2471, 7
    %v2473 = vsub.s32 1, %v2472
    %v2474 = vrot.slane %v2465, %v2473
    %v2475 = vcombine.low %v2470, %v2474
    %v2477 = vunpack.c.l.s4 1983009808
    %v2478 = vunpack.c.0.s8 %v2477
    %v2479 = vlaneseq
    %v2480 = vshrl.u32 %v2479, 7
    %v2481 = vsub.s32 %v2478, %v2480
    %v2482 = vrot.slane %v2475, %v2481
    %v2484 = vmul.f32 %v2464, %v2482
    %v2487 = vunpack.c.l.s4 1983009808
    %v2488 = vunpack.c.0.s8 %v2487
    %v2489 = vlaneseq
    %v2490 = vshrl.u32 %v2489, 7
    %v2491 = vsub.s32 %v2488, %v2490
    %v2492 = vrot.slane %v2484, %v2491
    %v2493 = vcombine.high %v2492, %v2492
    %vm2496 = vcmask 1041408
    %v2497 = vsel %vm2496, %v2492, 0.0
    %v2498 = vsel %vm2496, %v2493, 0.0
    %v2499 = vadd.f32 %v2497, %v2498
    %2500 = vadd.xlane.f32.xlu0 %v2499
    %v2501 = vpop.xlane.xlu0 %2500
    %v2502 = vld [vmem:[#allocation3] sm:$0x1]
    %v2504 = vlaneseq
    %v2505 = vshrl.u32 %v2504, 7
    %v2506 = vsub.s32 0, %v2505
    %v2507 = vrot.slane %v2502, %v2506
    %v2509 = vadd.f32 %v2501, %v2507
    %vm2510 = vcmask 1024
    %2511 = vst.msk [vmem:[%s7] sm:$0x3] %vm2510, %v2509
    // Predicated region
    $region42: #{bilstm_forward.1} parent=1 // pred_check
      _
    $region43: #{bilstm_forward.1} parent=1 // pred_check_branch
      %2513 = sbr.rel (0) target = $region45
    $region44: #{bilstm_forward.1} parent=1 // pred_region
      _
    $region45: #{bilstm_forward.1} parent=1 // pred_fallthru
      _
    // Predicated region
    $region46: #{bilstm_forward.1} parent=1 // pred_check
      _
    $region47: #{bilstm_forward.1} parent=1 // pred_check_branch
      %2515 = sbr.rel (0) target = $region49
    $region48: #{bilstm_forward.1} parent=1 // pred_region
      _
    $region49: #{bilstm_forward.1} parent=1 // pred_fallthru
      _
    %2516 = vsyncpa [#allocation5], 1
    %2517 = vsyncpa [#allocation7], 1

</llo_original>
